<compile_context>
chip_gen: v5e
topology: v5e:2x2
jax: 0.10.0
libtpu: 0.0.40
codegen_flags: <defaults>
</compile_context>

<pallas_src>
import functools
import math

import numpy as np
import jax
import jax.numpy as jnp
from jax.experimental import pallas as pl
from jax.experimental.pallas import tpu as pltpu

# ---------------------------- config (in-script "yaml") ----------------------------
NC = 4                       # number of classes
NA = 3                       # anchors per level
NO = NC + 5                  # outputs per anchor
CDET = NA * NO               # detect conv output channels (27)
CPAD = 32                    # detect channels padded to a lane-friendly width
ANCHORS = [[10, 13, 16, 30, 33, 23],
           [30, 61, 62, 45, 59, 119],
           [116, 90, 156, 198, 373, 326]]
STRIDES = [8.0, 16.0, 32.0]                  # detect levels come from layers 2,3,4
CHANNELS = [3, 16, 32, 32, 32, 32]           # backbone channel progression
DETECT_FROM = (2, 3, 4)                      # layer indices feeding Detect


# --------------------------------- Pallas kernel ------------------------------------
def _make_level_kernel(n_bb):
    """Fused detect level on a packed (pair-of-cells per row) tile:
    n_bb chained (1x1 conv + SiLU) layers, detect 1x1 conv, sigmoid and box decode."""

    def kernel(*refs):
        x_ref, rc_ref = refs[0], refs[1]
        o_ref = refs[-1]
        wb = refs[2:2 + 2 * n_bb]                        # (w0, b0, w1, b1, ...)
        wd_ref, bd_ref, cc_ref = refs[2 + 2 * n_bb:-1]   # detect w/b + column constants

        # ---- fused backbone chain (intermediates never leave VMEM/vregs) ----
        h = x_ref[...]
        for li in range(n_bb):
            t = jnp.dot(h, wb[2 * li][...], preferred_element_type=jnp.float32)
            t = t + wb[2 * li + 1][...]
            # SiLU with sigmoid(t) = 0.5*tanh(t/2)+0.5: single EUP op, no exp+divide
            h = t * (0.5 * jnp.tanh(0.5 * t) + 0.5)

        # ---- detect 1x1 conv (packed, Cout padded 27 -> 32 per half) ----
        td = jnp.dot(h, wd_ref[...], preferred_element_type=jnp.float32) + bd_ref[...]
        y = 0.5 * jnp.tanh(0.5 * td) + 0.5               # sigmoid via single tanh

        # ---- box decode folded into per-column constants ----
        #   dec = y*(A + y*B) + gx*Cx + gy*Cy + C0   (per packed half)
        cc = cc_ref[...]
        rc = rc_ref[...]                                 # [gx0, gy0, gx1, gy1]
        add = (rc[:, 0:1] * cc[2:3, :] + rc[:, 1:2] * cc[3:4, :] +
               rc[:, 2:3] * cc[4:5, :] + rc[:, 3:4] * cc[5:6, :] + cc[6:7, :])
        dec = y * (cc[0:1, :] + y * cc[1:2, :]) + add

        # 128-lane-dense output slab: [t(2r) | t(2r+1) | dec(2r) | dec(2r+1)]
        # (no concat temp; the HBM writeback is one dense 128-wide tile)
        o_ref[:, 0:2 * CPAD] = td
        o_ref[:, 2 * CPAD:4 * CPAD] = dec

    return kernel


def _choose_row_tiling(m2, target=2048):
    """Pick (padded packed-row count, packed-row tile).

    Tiles are large (few ~0.35us grid steps) but the grid stays >= 2 whenever there is
    enough work, so dimension_semantics=("parallel",) can shard across v7x's two TCs."""
    if m2 < 16:                                 # too small for two 8-aligned tiles
        return m2, m2
    m2p = -(-m2 // 16) * 16                     # pad so an even 8-aligned split exists
    half = m2p // 2
    if half <= target:
        return m2p, half                        # grid = 2
    # largest 8-aligned divisor of m2p below target (grid >= 4); fall back to grid = 2
    tm2 = max((t for t in range(8, target + 1, 8) if m2p % t == 0), default=half)
    return m2p, tm2


def detect_level_fused(xp, rc, params, lvl, n_bb, tm2):
    """One pallas_call per detect level: row tiles over packed rows, weights resident."""
    M2p, cin2 = xp.shape
    grid = (M2p // tm2,)

    def const_spec(shape):
        return pl.BlockSpec(shape, lambda i: (0, 0))

    operands = [xp, rc]
    in_specs = [pl.BlockSpec((tm2, cin2), lambda i: (i, 0)),
                pl.BlockSpec((tm2, 4), lambda i: (i, 0))]
    matmul_shapes = []
    for li in range(n_bb):
        wp, bp = params["backbone_packed"][li]
        operands += [wp, bp]
        in_specs += [const_spec(wp.shape), const_spec(bp.shape)]
        matmul_shapes.append(wp.shape)
    wdp, bdp = params["detect_packed"][lvl]
    cc = params["colconst"][lvl]
    operands += [wdp, bdp, cc]
    in_specs += [const_spec(wdp.shape), const_spec(bdp.shape), const_spec(cc.shape)]
    matmul_shapes.append(wdp.shape)

    # advisory cost: block-diagonal weight halves are structural zeros -> /2 on flops
    flops = int(M2p * sum(k * n for k, n in matmul_shapes))
    transcendentals = int(M2p * sum(n for _, n in matmul_shapes))   # one tanh / out elem
    const_bytes = 4 * sum(int(np.prod(o.shape)) for o in operands[2:])
    bytes_accessed = int(4 * (xp.size + rc.size + M2p * 4 * CPAD) + const_bytes)

    # VMEM footprint: double-buffered row tiles + resident constants + headroom
    tile_bytes = 4 * tm2 * (cin2 + 4 + 4 * CPAD)
    vmem_limit = int(min(64 * 1024 * 1024,
                         max(4 * 1024 * 1024,
                             3 * tile_bytes + 2 * const_bytes + (1 << 20))))

    kernel = _make_level_kernel(n_bb)
    return pl.pallas_call(
        kernel,
        out_shape=jax.ShapeDtypeStruct((M2p, 4 * CPAD), jnp.float32),
        grid=grid,
        in_specs=in_specs,
        out_specs=pl.BlockSpec((tm2, 4 * CPAD), lambda i: (i, 0)),
        compiler_params=pltpu.CompilerParams(
            dimension_semantics=("parallel",),       # shard row tiles across TCs (v7x)
            vmem_limit_bytes=vmem_limit),
        cost_estimate=pl.CostEstimate(flops=flops,
                                      transcendentals=transcendentals,
                                      bytes_accessed=bytes_accessed),
    )(*operands)


# ------------------------------ parameter construction ------------------------------
def _block_diag_pack(w, b):
    """Pack a 1x1-conv weight/bias for the pair-of-rows layout: blockdiag(W, W)."""
    cin, cout = w.shape
    wp = jnp.zeros((2 * cin, 2 * cout), w.dtype)
    wp = wp.at[:cin, :cout].set(w).at[cin:, cout:].set(w)
    bp = jnp.concatenate([b, b], axis=-1)
    return wp, bp


def init_params(key):
    params = {"backbone": [], "backbone_packed": [],
              "detect": [], "detect_packed": [], "colconst": []}
    keys = jax.random.split(key, len(CHANNELS) - 1 + len(STRIDES))

    # backbone: 1x1 stride-2 convs (BN folded into weight/bias) + SiLU
    for li in range(len(CHANNELS) - 1):
        cin, cout = CHANNELS[li], CHANNELS[li + 1]
        w = jax.random.normal(keys[li], (cin, cout), jnp.float32) / math.sqrt(cin)
        b = jnp.zeros((1, cout), jnp.float32)
        params["backbone"].append((w, b))
        params["backbone_packed"].append(_block_diag_pack(w, b))

    # detect convs + _initialize_biases() semantics, padded 27 -> 32 per packed half
    for lvl, f in enumerate(DETECT_FROM):
        cin = CHANNELS[f + 1]
        s = STRIDES[lvl]
        w = (jax.random.normal(keys[len(CHANNELS) - 1 + lvl], (cin, CDET), jnp.float32)
             / math.sqrt(cin)) * 0.01
        b = np.zeros((NA, NO), np.float32)
        b[:, 4] += math.log(8.0 / (640.0 / s) ** 2)                 # objectness prior
        b[:, 5:] += math.log(0.6 / (NC - 0.999999))                 # class prior
        b = jnp.asarray(b.reshape(1, -1))
        params["detect"].append((w, b))

        w_pad = jnp.zeros((cin, CPAD), jnp.float32).at[:, :CDET].set(w)
        b_pad = jnp.zeros((1, CPAD), jnp.float32).at[:, :CDET].set(b)
        params["detect_packed"].append(_block_diag_pack(w_pad, b_pad))

        # decode column constants (rows: A, B, Cx0, Cy0, Cx1, Cy1, C0, unused)
        #   dec = y*(A + y*B) + gx*Cx + gy*Cy + C0
        cc = np.zeros((8, 2 * CPAD), np.float32)
        for hh in range(2):                       # packed half (cell 2r / cell 2r+1)
            for c in range(CDET):
                col = hh * CPAD + c
                j = c % NO
                a = c // NO
                if j == 0:                        # x:  (2y - 0.5 + gx) * stride
                    cc[0, col] = 2.0 * s
                    cc[2 + 2 * hh, col] = s
                    cc[6, col] = -0.5 * s
                elif j == 1:                      # y:  (2y - 0.5 + gy) * stride
                    cc[0, col] = 2.0 * s
                    cc[3 + 2 * hh, col] = s
                    cc[6, col] = -0.5 * s
                elif j == 2:                      # w:  (2y)^2 * anchor_w
                    cc[1, col] = 4.0 * ANCHORS[lvl][2 * a]
                elif j == 3:                      # h:  (2y)^2 * anchor_h
                    cc[1, col] = 4.0 * ANCHORS[lvl][2 * a + 1]
                else:                             # obj/cls: identity on sigmoid
                    cc[0, col] = 1.0
        params["colconst"].append(jnp.asarray(cc))
    return params


# ----------------------------------- forward pass -----------------------------------
def model_forward(x_nchw, params, tile_rows=4096):
    """Inference forward: returns (cat(z, 1), [x0, x1, x2]) like Detect in eval mode."""
    x = jnp.transpose(x_nchw, (0, 2, 3, 1)).astype(jnp.float32)     # NCHW -> NHWC
    B = x.shape[0]

    # stride-8 subsample once; deeper levels derive from it (1 big strided gather, not 3)
    xs8 = x[:, ::8, ::8, :]
    level_inputs = [xs8, xs8[:, ::2, ::2, :], xs8[:, ::4, ::4, :]]

    z_list, x_list = [], []
    for lvl, f in enumerate(DETECT_FROM):
        n_bb = f + 1                      # backbone convs feeding this level
        xs = level_inputs[lvl]
        ny, nx = xs.shape[1], xs.shape[2]
        cin0 = xs.shape[3]
        M = B * ny * nx
        cells = ny * nx

        # exact integer grid coords per cell, computed once in XLA (rows ordered b,y,x)
        m = jnp.arange(M, dtype=jnp.int32)
        cell = m % cells
        gx = (cell % nx).astype(jnp.float32)
        gy = (cell // nx).astype(jnp.float32)
        gxy = jnp.stack([gx, gy], axis=-1)                          # (M, 2)

        # pack cells in pairs -> 128-lane-dense kernel rows/outputs
        M2 = -(-M // 2)
        M2p, tm2 = _choose_row_tiling(M2, target=max(8, tile_rows // 2))
        Mp = 2 * M2p
        xf = xs.reshape(M, cin0)
        if Mp > M:
            xf = jnp.pad(xf, ((0, Mp - M), (0, 0)))
            gxy = jnp.pad(gxy, ((0, Mp - M), (0, 0)))
        xp = xf.reshape(M2p, 2 * cin0)                              # [cell 2r | cell 2r+1]
        rc = gxy.reshape(M2p, 4)                                    # [gx0, gy0, gx1, gy1]

        out = detect_level_fused(xp, rc, params, lvl, n_bb, tm2)    # (M2p, 128)
        raw = out[:, :2 * CPAD].reshape(Mp, CPAD)[:M, :CDET]        # raw logits (torch x[i])
        dec = out[:, 2 * CPAD:].reshape(Mp, CPAD)[:M, :CDET]        # decoded     (torch y)

        # torch: x[i].view(bs, na, no, ny, nx).permute(0, 1, 3, 4, 2)
        raw5 = raw.reshape(B, ny, nx, NA, NO).transpose(0, 3, 1, 2, 4)
        dec5 = dec.reshape(B, ny, nx, NA, NO).transpose(0, 3, 1, 2, 4)
        x_list.append(raw5)
        z_list.append(dec5.reshape(B, NA * ny * nx, NO))            # y.view(bs,-1,no)

    return jnp.concatenate(z_list, axis=1), x_list


# -------------------------- pure-JAX reference (for checking) -----------------------
def model_forward_ref(x_nchw, params):
    """Layer-by-layer reference with the original per-layer structure (no Pallas)."""
    hp = jax.lax.Precision.HIGHEST
    x = jnp.transpose(x_nchw, (0, 2, 3, 1)).astype(jnp.float32)
    feats = []
    for li, (w, b) in enumerate(params["backbone"]):
        x = x[:, ::2, ::2, :]
        B, H, W, C = x.shape
        t = jnp.dot(x.reshape(B * H * W, C), w, precision=hp) + b
        x = (t * jax.nn.sigmoid(t)).reshape(B, H, W, w.shape[1])
        if li in DETECT_FROM:
            feats.append(x)

    z_list, x_list = [], []
    for lvl, feat in enumerate(feats):
        B, ny, nx, cin = feat.shape
        wd, bd = params["detect"][lvl]
        anch = np.zeros((1, CDET), np.float32)
        for a in range(NA):
            anch[0, a * NO + 2] = ANCHORS[lvl][2 * a]
            anch[0, a * NO + 3] = ANCHORS[lvl][2 * a + 1]
        anch = jnp.asarray(anch)

        yv, xv = jnp.meshgrid(jnp.arange(ny), jnp.arange(nx), indexing="ij")
        g2 = jnp.stack((xv, yv), -1).astype(jnp.float32)
        g2 = jnp.broadcast_to(g2[None], (B, ny, nx, 2)).reshape(B * ny * nx, 2)

        t = jnp.dot(feat.reshape(B * ny * nx, cin), wd, precision=hp) + bd
        y = jax.nn.sigmoid(t)
        j = jnp.arange(CDET) % NO
        g = jnp.where(j % 2 == 0, g2[:, 0:1], g2[:, 1:2])
        xy = (y * 2.0 - 0.5 + g) * STRIDES[lvl]
        wh = (y * 2.0) ** 2 * anch
        dec = jnp.where(j < 2, xy, jnp.where(j < 4, wh, y))

        raw5 = t.reshape(B, ny, nx, NA, NO).transpose(0, 3, 1, 2, 4)
        dec5 = dec.reshape(B, ny, nx, NA, NO).transpose(0, 3, 1, 2, 4)
        x_list.append(raw5)
        z_list.append(dec5.reshape(B, NA * ny * nx, NO))
    return jnp.concatenate(z_list, axis=1), x_list


# --------------------------------------- main ---------------------------------------
if __name__ == "__main__":
    key = jax.random.PRNGKey(0)
    kp, kx = jax.random.split(key)
    params = init_params(kp)

    x = jax.random.normal(kx, (2, 3, 64, 64), jnp.float32)          # NCHW, like torch

    # default tiling already yields grid=2 on levels 0/1 at this size (exercises the
    # multi-tile "parallel" path) and a single tile on the tiny level 2.
    fwd = jax.jit(functools.partial(model_forward, tile_rows=4096))
    z, xs = fwd(x, params)
    jax.block_until_ready(z)
    for xi in xs:
        jax.block_until_ready(xi)

    # shape sanity: total predictions = sum over levels of na*ny*nx = 3*(64+16+4) = 252
    assert z.shape == (2, 252, NO), z.shape
    assert xs[0].shape == (2, NA, 8, 8, NO)
    assert xs[1].shape == (2, NA, 4, 4, NO)
    assert xs[2].shape == (2, NA, 2, 2, NO)

    # numerical sanity vs. the layer-by-layer pure-JAX reference
    z_ref, xs_ref = jax.jit(model_forward_ref)(x, params)
    np.testing.assert_allclose(np.asarray(z), np.asarray(z_ref), rtol=5e-3, atol=5e-3)
    for a, b in zip(xs, xs_ref):
        np.testing.assert_allclose(np.asarray(a), np.asarray(b), rtol=5e-3, atol=5e-3)

    print("KERNEL_OK")
</pallas_src>

<mosaic_0001>
module attributes {stable_mosaic.version = 11 : i64} {
  func.func @kernel(%arg0: i32, %arg1: memref<32x6xf32, #tpu.memory_space<vmem>>, %arg2: memref<32x4xf32, #tpu.memory_space<vmem>>, %arg3: memref<6x32xf32, #tpu.memory_space<vmem>>, %arg4: memref<1x32xf32, #tpu.memory_space<vmem>>, %arg5: memref<32x64xf32, #tpu.memory_space<vmem>>, %arg6: memref<1x64xf32, #tpu.memory_space<vmem>>, %arg7: memref<64x64xf32, #tpu.memory_space<vmem>>, %arg8: memref<1x64xf32, #tpu.memory_space<vmem>>, %arg9: memref<64x64xf32, #tpu.memory_space<vmem>>, %arg10: memref<1x64xf32, #tpu.memory_space<vmem>>, %arg11: memref<8x64xf32, #tpu.memory_space<vmem>>, %arg12: memref<32x128xf32, #tpu.memory_space<vmem>>) attributes {dimension_semantics = [#tpu.dimension_semantics<parallel>], iteration_bounds = array<i64: 2>, scalar_prefetch = 0 : i64, scratch_operands = 0 : i64, tpu.core_type = #tpu.core_type<tc>, window_params = [{transform_indices = @transform_0, window_bounds = array<i64: 32, 6>}, {transform_indices = @transform_1, window_bounds = array<i64: 32, 4>}, {pipeline_mode = #tpu.pipeline_mode<synchronous>, transform_indices = @transform_2, window_bounds = array<i64: 6, 32>}, {pipeline_mode = #tpu.pipeline_mode<synchronous>, transform_indices = @transform_3, window_bounds = array<i64: 1, 32>}, {pipeline_mode = #tpu.pipeline_mode<synchronous>, transform_indices = @transform_4, window_bounds = array<i64: 32, 64>}, {pipeline_mode = #tpu.pipeline_mode<synchronous>, transform_indices = @transform_5, window_bounds = array<i64: 1, 64>}, {pipeline_mode = #tpu.pipeline_mode<synchronous>, transform_indices = @transform_6, window_bounds = array<i64: 64, 64>}, {pipeline_mode = #tpu.pipeline_mode<synchronous>, transform_indices = @transform_7, window_bounds = array<i64: 1, 64>}, {pipeline_mode = #tpu.pipeline_mode<synchronous>, transform_indices = @transform_8, window_bounds = array<i64: 64, 64>}, {pipeline_mode = #tpu.pipeline_mode<synchronous>, transform_indices = @transform_9, window_bounds = array<i64: 1, 64>}, {pipeline_mode = #tpu.pipeline_mode<synchronous>, transform_indices = @transform_10, window_bounds = array<i64: 8, 64>}, {transform_indices = @transform_11, window_bounds = array<i64: 32, 128>}]} {
    %c0 = arith.constant 0 : index
    %c0_0 = arith.constant 0 : index
    %0 = vector.load %arg1[%c0, %c0_0] : memref<32x6xf32, #tpu.memory_space<vmem>>, vector<32x6xf32>
    %c0_1 = arith.constant 0 : index
    %c0_2 = arith.constant 0 : index
    %1 = vector.load %arg3[%c0_1, %c0_2] : memref<6x32xf32, #tpu.memory_space<vmem>>, vector<6x32xf32>
    %cst = arith.constant dense<0.000000e+00> : vector<32x32xf32>
    %2 = tpu.matmul %0, %1, %cst {dimension_numbers = #tpu.dot_dimension_numbers<[1], [0], [0], [1], [0, 0, 1, 1], [], []>} : vector<32x6xf32>, vector<6x32xf32>, vector<32x32xf32> -> vector<32x32xf32>
    %c0_3 = arith.constant 0 : index
    %c0_4 = arith.constant 0 : index
    %3 = vector.load %arg4[%c0_3, %c0_4] : memref<1x32xf32, #tpu.memory_space<vmem>>, vector<1x32xf32>
    %4 = vector.broadcast %3 : vector<1x32xf32> to vector<32x32xf32>
    %5 = arith.addf %2, %4 : vector<32x32xf32>
    %cst_5 = arith.constant 5.000000e-01 : f32
    %6 = vector.broadcast %cst_5 : f32 to vector<32x32xf32>
    %7 = arith.mulf %6, %5 : vector<32x32xf32>
    %8 = math.tanh %7 : vector<32x32xf32>
    %cst_6 = arith.constant 5.000000e-01 : f32
    %9 = vector.broadcast %cst_6 : f32 to vector<32x32xf32>
    %10 = arith.mulf %9, %8 : vector<32x32xf32>
    %cst_7 = arith.constant 5.000000e-01 : f32
    %11 = vector.broadcast %cst_7 : f32 to vector<32x32xf32>
    %12 = arith.addf %10, %11 : vector<32x32xf32>
    %13 = arith.mulf %5, %12 : vector<32x32xf32>
    %c0_8 = arith.constant 0 : index
    %c0_9 = arith.constant 0 : index
    %14 = vector.load %arg5[%c0_8, %c0_9] : memref<32x64xf32, #tpu.memory_space<vmem>>, vector<32x64xf32>
    %cst_10 = arith.constant dense<0.000000e+00> : vector<32x64xf32>
    %15 = tpu.matmul %13, %14, %cst_10 {dimension_numbers = #tpu.dot_dimension_numbers<[1], [0], [0], [1], [0, 0, 1, 1], [], []>} : vector<32x32xf32>, vector<32x64xf32>, vector<32x64xf32> -> vector<32x64xf32>
    %c0_11 = arith.constant 0 : index
    %c0_12 = arith.constant 0 : index
    %16 = vector.load %arg6[%c0_11, %c0_12] : memref<1x64xf32, #tpu.memory_space<vmem>>, vector<1x64xf32>
    %17 = vector.broadcast %16 : vector<1x64xf32> to vector<32x64xf32>
    %18 = arith.addf %15, %17 : vector<32x64xf32>
    %cst_13 = arith.constant 5.000000e-01 : f32
    %19 = vector.broadcast %cst_13 : f32 to vector<32x64xf32>
    %20 = arith.mulf %19, %18 : vector<32x64xf32>
    %21 = math.tanh %20 : vector<32x64xf32>
    %cst_14 = arith.constant 5.000000e-01 : f32
    %22 = vector.broadcast %cst_14 : f32 to vector<32x64xf32>
    %23 = arith.mulf %22, %21 : vector<32x64xf32>
    %cst_15 = arith.constant 5.000000e-01 : f32
    %24 = vector.broadcast %cst_15 : f32 to vector<32x64xf32>
    %25 = arith.addf %23, %24 : vector<32x64xf32>
    %26 = arith.mulf %18, %25 : vector<32x64xf32>
    %c0_16 = arith.constant 0 : index
    %c0_17 = arith.constant 0 : index
    %27 = vector.load %arg7[%c0_16, %c0_17] : memref<64x64xf32, #tpu.memory_space<vmem>>, vector<64x64xf32>
    %cst_18 = arith.constant dense<0.000000e+00> : vector<32x64xf32>
    %28 = tpu.matmul %26, %27, %cst_18 {dimension_numbers = #tpu.dot_dimension_numbers<[1], [0], [0], [1], [0, 0, 1, 1], [], []>} : vector<32x64xf32>, vector<64x64xf32>, vector<32x64xf32> -> vector<32x64xf32>
    %c0_19 = arith.constant 0 : index
    %c0_20 = arith.constant 0 : index
    %29 = vector.load %arg8[%c0_19, %c0_20] : memref<1x64xf32, #tpu.memory_space<vmem>>, vector<1x64xf32>
    %30 = vector.broadcast %29 : vector<1x64xf32> to vector<32x64xf32>
    %31 = arith.addf %28, %30 : vector<32x64xf32>
    %cst_21 = arith.constant 5.000000e-01 : f32
    %32 = vector.broadcast %cst_21 : f32 to vector<32x64xf32>
    %33 = arith.mulf %32, %31 : vector<32x64xf32>
    %34 = math.tanh %33 : vector<32x64xf32>
    %cst_22 = arith.constant 5.000000e-01 : f32
    %35 = vector.broadcast %cst_22 : f32 to vector<32x64xf32>
    %36 = arith.mulf %35, %34 : vector<32x64xf32>
    %cst_23 = arith.constant 5.000000e-01 : f32
    %37 = vector.broadcast %cst_23 : f32 to vector<32x64xf32>
    %38 = arith.addf %36, %37 : vector<32x64xf32>
    %39 = arith.mulf %31, %38 : vector<32x64xf32>
    %c0_24 = arith.constant 0 : index
    %c0_25 = arith.constant 0 : index
    %40 = vector.load %arg9[%c0_24, %c0_25] : memref<64x64xf32, #tpu.memory_space<vmem>>, vector<64x64xf32>
    %cst_26 = arith.constant dense<0.000000e+00> : vector<32x64xf32>
    %41 = tpu.matmul %39, %40, %cst_26 {dimension_numbers = #tpu.dot_dimension_numbers<[1], [0], [0], [1], [0, 0, 1, 1], [], []>} : vector<32x64xf32>, vector<64x64xf32>, vector<32x64xf32> -> vector<32x64xf32>
    %c0_27 = arith.constant 0 : index
    %c0_28 = arith.constant 0 : index
    %42 = vector.load %arg10[%c0_27, %c0_28] : memref<1x64xf32, #tpu.memory_space<vmem>>, vector<1x64xf32>
    %43 = vector.broadcast %42 : vector<1x64xf32> to vector<32x64xf32>
    %44 = arith.addf %41, %43 : vector<32x64xf32>
    %cst_29 = arith.constant 5.000000e-01 : f32
    %45 = vector.broadcast %cst_29 : f32 to vector<32x64xf32>
    %46 = arith.mulf %45, %44 : vector<32x64xf32>
    %47 = math.tanh %46 : vector<32x64xf32>
    %cst_30 = arith.constant 5.000000e-01 : f32
    %48 = vector.broadcast %cst_30 : f32 to vector<32x64xf32>
    %49 = arith.mulf %48, %47 : vector<32x64xf32>
    %cst_31 = arith.constant 5.000000e-01 : f32
    %50 = vector.broadcast %cst_31 : f32 to vector<32x64xf32>
    %51 = arith.addf %49, %50 : vector<32x64xf32>
    %c0_32 = arith.constant 0 : index
    %c0_33 = arith.constant 0 : index
    %52 = vector.load %arg11[%c0_32, %c0_33] : memref<8x64xf32, #tpu.memory_space<vmem>>, vector<8x64xf32>
    %c0_34 = arith.constant 0 : index
    %c0_35 = arith.constant 0 : index
    %53 = vector.load %arg2[%c0_34, %c0_35] : memref<32x4xf32, #tpu.memory_space<vmem>>, vector<32x4xf32>
    %54 = vector.extract_strided_slice %53 {offsets = [0, 0], sizes = [32, 1], strides = [1, 1]} : vector<32x4xf32> to vector<32x1xf32>
    %55 = vector.extract_strided_slice %52 {offsets = [2, 0], sizes = [1, 64], strides = [1, 1]} : vector<8x64xf32> to vector<1x64xf32>
    %56 = vector.broadcast %54 : vector<32x1xf32> to vector<32x64xf32>
    %57 = vector.broadcast %55 : vector<1x64xf32> to vector<32x64xf32>
    %58 = arith.mulf %56, %57 : vector<32x64xf32>
    %59 = vector.extract_strided_slice %53 {offsets = [0, 1], sizes = [32, 1], strides = [1, 1]} : vector<32x4xf32> to vector<32x1xf32>
    %60 = vector.extract_strided_slice %52 {offsets = [3, 0], sizes = [1, 64], strides = [1, 1]} : vector<8x64xf32> to vector<1x64xf32>
    %61 = vector.broadcast %59 : vector<32x1xf32> to vector<32x64xf32>
    %62 = vector.broadcast %60 : vector<1x64xf32> to vector<32x64xf32>
    %63 = arith.mulf %61, %62 : vector<32x64xf32>
    %64 = arith.addf %58, %63 : vector<32x64xf32>
    %65 = vector.extract_strided_slice %53 {offsets = [0, 2], sizes = [32, 1], strides = [1, 1]} : vector<32x4xf32> to vector<32x1xf32>
    %66 = vector.extract_strided_slice %52 {offsets = [4, 0], sizes = [1, 64], strides = [1, 1]} : vector<8x64xf32> to vector<1x64xf32>
    %67 = vector.broadcast %65 : vector<32x1xf32> to vector<32x64xf32>
    %68 = vector.broadcast %66 : vector<1x64xf32> to vector<32x64xf32>
    %69 = arith.mulf %67, %68 : vector<32x64xf32>
    %70 = arith.addf %64, %69 : vector<32x64xf32>
    %71 = vector.extract_strided_slice %53 {offsets = [0, 3], sizes = [32, 1], strides = [1, 1]} : vector<32x4xf32> to vector<32x1xf32>
    %72 = vector.extract_strided_slice %52 {offsets = [5, 0], sizes = [1, 64], strides = [1, 1]} : vector<8x64xf32> to vector<1x64xf32>
    %73 = vector.broadcast %71 : vector<32x1xf32> to vector<32x64xf32>
    %74 = vector.broadcast %72 : vector<1x64xf32> to vector<32x64xf32>
    %75 = arith.mulf %73, %74 : vector<32x64xf32>
    %76 = arith.addf %70, %75 : vector<32x64xf32>
    %77 = vector.extract_strided_slice %52 {offsets = [6, 0], sizes = [1, 64], strides = [1, 1]} : vector<8x64xf32> to vector<1x64xf32>
    %78 = vector.broadcast %77 : vector<1x64xf32> to vector<32x64xf32>
    %79 = arith.addf %76, %78 : vector<32x64xf32>
    %80 = vector.extract_strided_slice %52 {offsets = [0, 0], sizes = [1, 64], strides = [1, 1]} : vector<8x64xf32> to vector<1x64xf32>
    %81 = vector.extract_strided_slice %52 {offsets = [1, 0], sizes = [1, 64], strides = [1, 1]} : vector<8x64xf32> to vector<1x64xf32>
    %82 = vector.broadcast %81 : vector<1x64xf32> to vector<32x64xf32>
    %83 = arith.mulf %51, %82 : vector<32x64xf32>
    %84 = vector.broadcast %80 : vector<1x64xf32> to vector<32x64xf32>
    %85 = arith.addf %84, %83 : vector<32x64xf32>
    %86 = arith.mulf %51, %85 : vector<32x64xf32>
    %87 = arith.addf %86, %79 : vector<32x64xf32>
    %c0_36 = arith.constant 0 : index
    %c0_37 = arith.constant 0 : index
    %88 = vector.load %arg12[%c0_36, %c0_37] : memref<32x128xf32, #tpu.memory_space<vmem>>, vector<32x64xf32>
    tpu.vector_store %arg12[%c0_36, %c0_37], %44 {strides = array<i32>} : memref<32x128xf32, #tpu.memory_space<vmem>>, vector<32x64xf32>,
    %c0_38 = arith.constant 0 : index
    %c64 = arith.constant 64 : index
    %89 = vector.load %arg12[%c0_38, %c64] : memref<32x128xf32, #tpu.memory_space<vmem>>, vector<32x64xf32>
    tpu.vector_store %arg12[%c0_38, %c64], %87 {strides = array<i32>} : memref<32x128xf32, #tpu.memory_space<vmem>>, vector<32x64xf32>,
    return
  }
  func.func @transform_0(%arg0: i32) -> (i32, i32) {
    %c0_i32 = arith.constant 0 : i32
    %c0_i32_0 = arith.constant 0 : i32
    return %arg0, %c0_i32 : i32, i32
  }
  func.func @transform_1(%arg0: i32) -> (i32, i32) {
    %c0_i32 = arith.constant 0 : i32
    %c0_i32_0 = arith.constant 0 : i32
    return %arg0, %c0_i32 : i32, i32
  }
  func.func @transform_2(%arg0: i32) -> (i32, i32) {
    %c0_i32 = arith.constant 0 : i32
    %c0_i32_0 = arith.constant 0 : i32
    %c0_i32_1 = arith.constant 0 : i32
    return %c0_i32, %c0_i32_0 : i32, i32
  }
  func.func @transform_3(%arg0: i32) -> (i32, i32) {
    %c0_i32 = arith.constant 0 : i32
    %c0_i32_0 = arith.constant 0 : i32
    %c0_i32_1 = arith.constant 0 : i32
    return %c0_i32, %c0_i32_0 : i32, i32
  }
  func.func @transform_4(%arg0: i32) -> (i32, i32) {
    %c0_i32 = arith.constant 0 : i32
    %c0_i32_0 = arith.constant 0 : i32
    %c0_i32_1 = arith.constant 0 : i32
    return %c0_i32, %c0_i32_0 : i32, i32
  }
  func.func @transform_5(%arg0: i32) -> (i32, i32) {
    %c0_i32 = arith.constant 0 : i32
    %c0_i32_0 = arith.constant 0 : i32
    %c0_i32_1 = arith.constant 0 : i32
    return %c0_i32, %c0_i32_0 : i32, i32
  }
  func.func @transform_6(%arg0: i32) -> (i32, i32) {
    %c0_i32 = arith.constant 0 : i32
    %c0_i32_0 = arith.constant 0 : i32
    %c0_i32_1 = arith.constant 0 : i32
    return %c0_i32, %c0_i32_0 : i32, i32
  }
  func.func @transform_7(%arg0: i32) -> (i32, i32) {
    %c0_i32 = arith.constant 0 : i32
    %c0_i32_0 = arith.constant 0 : i32
    %c0_i32_1 = arith.constant 0 : i32
    return %c0_i32, %c0_i32_0 : i32, i32
  }
  func.func @transform_8(%arg0: i32) -> (i32, i32) {
    %c0_i32 = arith.constant 0 : i32
    %c0_i32_0 = arith.constant 0 : i32
    %c0_i32_1 = arith.constant 0 : i32
    return %c0_i32, %c0_i32_0 : i32, i32
  }
  func.func @transform_9(%arg0: i32) -> (i32, i32) {
    %c0_i32 = arith.constant 0 : i32
    %c0_i32_0 = arith.constant 0 : i32
    %c0_i32_1 = arith.constant 0 : i32
    return %c0_i32, %c0_i32_0 : i32, i32
  }
  func.func @transform_10(%arg0: i32) -> (i32, i32) {
    %c0_i32 = arith.constant 0 : i32
    %c0_i32_0 = arith.constant 0 : i32
    %c0_i32_1 = arith.constant 0 : i32
    return %c0_i32, %c0_i32_0 : i32, i32
  }
  func.func @transform_11(%arg0: i32) -> (i32, i32) {
    %c0_i32 = arith.constant 0 : i32
    %c0_i32_0 = arith.constant 0 : i32
    return %arg0, %c0_i32 : i32, i32
  }
}

module attributes {stable_mosaic.version = 11 : i64} {
  func.func @kernel(%arg0: i32, %arg1: memref<8x6xf32, #tpu.memory_space<vmem>>, %arg2: memref<8x4xf32, #tpu.memory_space<vmem>>, %arg3: memref<6x32xf32, #tpu.memory_space<vmem>>, %arg4: memref<1x32xf32, #tpu.memory_space<vmem>>, %arg5: memref<32x64xf32, #tpu.memory_space<vmem>>, %arg6: memref<1x64xf32, #tpu.memory_space<vmem>>, %arg7: memref<64x64xf32, #tpu.memory_space<vmem>>, %arg8: memref<1x64xf32, #tpu.memory_space<vmem>>, %arg9: memref<64x64xf32, #tpu.memory_space<vmem>>, %arg10: memref<1x64xf32, #tpu.memory_space<vmem>>, %arg11: memref<64x64xf32, #tpu.memory_space<vmem>>, %arg12: memref<1x64xf32, #tpu.memory_space<vmem>>, %arg13: memref<8x64xf32, #tpu.memory_space<vmem>>, %arg14: memref<8x128xf32, #tpu.memory_space<vmem>>) attributes {dimension_semantics = [#tpu.dimension_semantics<parallel>], iteration_bounds = array<i64: 2>, scalar_prefetch = 0 : i64, scratch_operands = 0 : i64, tpu.core_type = #tpu.core_type<tc>, window_params = [{transform_indices = @transform_0, window_bounds = array<i64: 8, 6>}, {transform_indices = @transform_1, window_bounds = array<i64: 8, 4>}, {pipeline_mode = #tpu.pipeline_mode<synchronous>, transform_indices = @transform_2, window_bounds = array<i64: 6, 32>}, {pipeline_mode = #tpu.pipeline_mode<synchronous>, transform_indices = @transform_3, window_bounds = array<i64: 1, 32>}, {pipeline_mode = #tpu.pipeline_mode<synchronous>, transform_indices = @transform_4, window_bounds = array<i64: 32, 64>}, {pipeline_mode = #tpu.pipeline_mode<synchronous>, transform_indices = @transform_5, window_bounds = array<i64: 1, 64>}, {pipeline_mode = #tpu.pipeline_mode<synchronous>, transform_indices = @transform_6, window_bounds = array<i64: 64, 64>}, {pipeline_mode = #tpu.pipeline_mode<synchronous>, transform_indices = @transform_7, window_bounds = array<i64: 1, 64>}, {pipeline_mode = #tpu.pipeline_mode<synchronous>, transform_indices = @transform_8, window_bounds = array<i64: 64, 64>}, {pipeline_mode = #tpu.pipeline_mode<synchronous>, transform_indices = @transform_9, window_bounds = array<i64: 1, 64>}, {pipeline_mode = #tpu.pipeline_mode<synchronous>, transform_indices = @transform_10, window_bounds = array<i64: 64, 64>}, {pipeline_mode = #tpu.pipeline_mode<synchronous>, transform_indices = @transform_11, window_bounds = array<i64: 1, 64>}, {pipeline_mode = #tpu.pipeline_mode<synchronous>, transform_indices = @transform_12, window_bounds = array<i64: 8, 64>}, {transform_indices = @transform_13, window_bounds = array<i64: 8, 128>}]} {
    %c0 = arith.constant 0 : index
    %c0_0 = arith.constant 0 : index
    %0 = vector.load %arg1[%c0, %c0_0] : memref<8x6xf32, #tpu.memory_space<vmem>>, vector<8x6xf32>
    %c0_1 = arith.constant 0 : index
    %c0_2 = arith.constant 0 : index
    %1 = vector.load %arg3[%c0_1, %c0_2] : memref<6x32xf32, #tpu.memory_space<vmem>>, vector<6x32xf32>
    %cst = arith.constant dense<0.000000e+00> : vector<8x32xf32>
    %2 = tpu.matmul %0, %1, %cst {dimension_numbers = #tpu.dot_dimension_numbers<[1], [0], [0], [1], [0, 0, 1, 1], [], []>} : vector<8x6xf32>, vector<6x32xf32>, vector<8x32xf32> -> vector<8x32xf32>
    %c0_3 = arith.constant 0 : index
    %c0_4 = arith.constant 0 : index
    %3 = vector.load %arg4[%c0_3, %c0_4] : memref<1x32xf32, #tpu.memory_space<vmem>>, vector<1x32xf32>
    %4 = vector.broadcast %3 : vector<1x32xf32> to vector<8x32xf32>
    %5 = arith.addf %2, %4 : vector<8x32xf32>
    %cst_5 = arith.constant 5.000000e-01 : f32
    %6 = vector.broadcast %cst_5 : f32 to vector<8x32xf32>
    %7 = arith.mulf %6, %5 : vector<8x32xf32>
    %8 = math.tanh %7 : vector<8x32xf32>
    %cst_6 = arith.constant 5.000000e-01 : f32
    %9 = vector.broadcast %cst_6 : f32 to vector<8x32xf32>
    %10 = arith.mulf %9, %8 : vector<8x32xf32>
    %cst_7 = arith.constant 5.000000e-01 : f32
    %11 = vector.broadcast %cst_7 : f32 to vector<8x32xf32>
    %12 = arith.addf %10, %11 : vector<8x32xf32>
    %13 = arith.mulf %5, %12 : vector<8x32xf32>
    %c0_8 = arith.constant 0 : index
    %c0_9 = arith.constant 0 : index
    %14 = vector.load %arg5[%c0_8, %c0_9] : memref<32x64xf32, #tpu.memory_space<vmem>>, vector<32x64xf32>
    %cst_10 = arith.constant dense<0.000000e+00> : vector<8x64xf32>
    %15 = tpu.matmul %13, %14, %cst_10 {dimension_numbers = #tpu.dot_dimension_numbers<[1], [0], [0], [1], [0, 0, 1, 1], [], []>} : vector<8x32xf32>, vector<32x64xf32>, vector<8x64xf32> -> vector<8x64xf32>
    %c0_11 = arith.constant 0 : index
    %c0_12 = arith.constant 0 : index
    %16 = vector.load %arg6[%c0_11, %c0_12] : memref<1x64xf32, #tpu.memory_space<vmem>>, vector<1x64xf32>
    %17 = vector.broadcast %16 : vector<1x64xf32> to vector<8x64xf32>
    %18 = arith.addf %15, %17 : vector<8x64xf32>
    %cst_13 = arith.constant 5.000000e-01 : f32
    %19 = vector.broadcast %cst_13 : f32 to vector<8x64xf32>
    %20 = arith.mulf %19, %18 : vector<8x64xf32>
    %21 = math.tanh %20 : vector<8x64xf32>
    %cst_14 = arith.constant 5.000000e-01 : f32
    %22 = vector.broadcast %cst_14 : f32 to vector<8x64xf32>
    %23 = arith.mulf %22, %21 : vector<8x64xf32>
    %cst_15 = arith.constant 5.000000e-01 : f32
    %24 = vector.broadcast %cst_15 : f32 to vector<8x64xf32>
    %25 = arith.addf %23, %24 : vector<8x64xf32>
    %26 = arith.mulf %18, %25 : vector<8x64xf32>
    %c0_16 = arith.constant 0 : index
    %c0_17 = arith.constant 0 : index
    %27 = vector.load %arg7[%c0_16, %c0_17] : memref<64x64xf32, #tpu.memory_space<vmem>>, vector<64x64xf32>
    %cst_18 = arith.constant dense<0.000000e+00> : vector<8x64xf32>
    %28 = tpu.matmul %26, %27, %cst_18 {dimension_numbers = #tpu.dot_dimension_numbers<[1], [0], [0], [1], [0, 0, 1, 1], [], []>} : vector<8x64xf32>, vector<64x64xf32>, vector<8x64xf32> -> vector<8x64xf32>
    %c0_19 = arith.constant 0 : index
    %c0_20 = arith.constant 0 : index
    %29 = vector.load %arg8[%c0_19, %c0_20] : memref<1x64xf32, #tpu.memory_space<vmem>>, vector<1x64xf32>
    %30 = vector.broadcast %29 : vector<1x64xf32> to vector<8x64xf32>
    %31 = arith.addf %28, %30 : vector<8x64xf32>
    %cst_21 = arith.constant 5.000000e-01 : f32
    %32 = vector.broadcast %cst_21 : f32 to vector<8x64xf32>
    %33 = arith.mulf %32, %31 : vector<8x64xf32>
    %34 = math.tanh %33 : vector<8x64xf32>
    %cst_22 = arith.constant 5.000000e-01 : f32
    %35 = vector.broadcast %cst_22 : f32 to vector<8x64xf32>
    %36 = arith.mulf %35, %34 : vector<8x64xf32>
    %cst_23 = arith.constant 5.000000e-01 : f32
    %37 = vector.broadcast %cst_23 : f32 to vector<8x64xf32>
    %38 = arith.addf %36, %37 : vector<8x64xf32>
    %39 = arith.mulf %31, %38 : vector<8x64xf32>
    %c0_24 = arith.constant 0 : index
    %c0_25 = arith.constant 0 : index
    %40 = vector.load %arg9[%c0_24, %c0_25] : memref<64x64xf32, #tpu.memory_space<vmem>>, vector<64x64xf32>
    %cst_26 = arith.constant dense<0.000000e+00> : vector<8x64xf32>
    %41 = tpu.matmul %39, %40, %cst_26 {dimension_numbers = #tpu.dot_dimension_numbers<[1], [0], [0], [1], [0, 0, 1, 1], [], []>} : vector<8x64xf32>, vector<64x64xf32>, vector<8x64xf32> -> vector<8x64xf32>
    %c0_27 = arith.constant 0 : index
    %c0_28 = arith.constant 0 : index
    %42 = vector.load %arg10[%c0_27, %c0_28] : memref<1x64xf32, #tpu.memory_space<vmem>>, vector<1x64xf32>
    %43 = vector.broadcast %42 : vector<1x64xf32> to vector<8x64xf32>
    %44 = arith.addf %41, %43 : vector<8x64xf32>
    %cst_29 = arith.constant 5.000000e-01 : f32
    %45 = vector.broadcast %cst_29 : f32 to vector<8x64xf32>
    %46 = arith.mulf %45, %44 : vector<8x64xf32>
    %47 = math.tanh %46 : vector<8x64xf32>
    %cst_30 = arith.constant 5.000000e-01 : f32
    %48 = vector.broadcast %cst_30 : f32 to vector<8x64xf32>
    %49 = arith.mulf %48, %47 : vector<8x64xf32>
    %cst_31 = arith.constant 5.000000e-01 : f32
    %50 = vector.broadcast %cst_31 : f32 to vector<8x64xf32>
    %51 = arith.addf %49, %50 : vector<8x64xf32>
    %52 = arith.mulf %44, %51 : vector<8x64xf32>
    %c0_32 = arith.constant 0 : index
    %c0_33 = arith.constant 0 : index
    %53 = vector.load %arg11[%c0_32, %c0_33] : memref<64x64xf32, #tpu.memory_space<vmem>>, vector<64x64xf32>
    %cst_34 = arith.constant dense<0.000000e+00> : vector<8x64xf32>
    %54 = tpu.matmul %52, %53, %cst_34 {dimension_numbers = #tpu.dot_dimension_numbers<[1], [0], [0], [1], [0, 0, 1, 1], [], []>} : vector<8x64xf32>, vector<64x64xf32>, vector<8x64xf32> -> vector<8x64xf32>
    %c0_35 = arith.constant 0 : index
    %c0_36 = arith.constant 0 : index
    %55 = vector.load %arg12[%c0_35, %c0_36] : memref<1x64xf32, #tpu.memory_space<vmem>>, vector<1x64xf32>
    %56 = vector.broadcast %55 : vector<1x64xf32> to vector<8x64xf32>
    %57 = arith.addf %54, %56 : vector<8x64xf32>
    %cst_37 = arith.constant 5.000000e-01 : f32
    %58 = vector.broadcast %cst_37 : f32 to vector<8x64xf32>
    %59 = arith.mulf %58, %57 : vector<8x64xf32>
    %60 = math.tanh %59 : vector<8x64xf32>
    %cst_38 = arith.constant 5.000000e-01 : f32
    %61 = vector.broadcast %cst_38 : f32 to vector<8x64xf32>
    %62 = arith.mulf %61, %60 : vector<8x64xf32>
    %cst_39 = arith.constant 5.000000e-01 : f32
    %63 = vector.broadcast %cst_39 : f32 to vector<8x64xf32>
    %64 = arith.addf %62, %63 : vector<8x64xf32>
    %c0_40 = arith.constant 0 : index
    %c0_41 = arith.constant 0 : index
    %65 = vector.load %arg13[%c0_40, %c0_41] : memref<8x64xf32, #tpu.memory_space<vmem>>, vector<8x64xf32>
    %c0_42 = arith.constant 0 : index
    %c0_43 = arith.constant 0 : index
    %66 = vector.load %arg2[%c0_42, %c0_43] : memref<8x4xf32, #tpu.memory_space<vmem>>, vector<8x4xf32>
    %67 = vector.extract_strided_slice %66 {offsets = [0, 0], sizes = [8, 1], strides = [1, 1]} : vector<8x4xf32> to vector<8x1xf32>
    %68 = vector.extract_strided_slice %65 {offsets = [2, 0], sizes = [1, 64], strides = [1, 1]} : vector<8x64xf32> to vector<1x64xf32>
    %69 = vector.broadcast %67 : vector<8x1xf32> to vector<8x64xf32>
    %70 = vector.broadcast %68 : vector<1x64xf32> to vector<8x64xf32>
    %71 = arith.mulf %69, %70 : vector<8x64xf32>
    %72 = vector.extract_strided_slice %66 {offsets = [0, 1], sizes = [8, 1], strides = [1, 1]} : vector<8x4xf32> to vector<8x1xf32>
    %73 = vector.extract_strided_slice %65 {offsets = [3, 0], sizes = [1, 64], strides = [1, 1]} : vector<8x64xf32> to vector<1x64xf32>
    %74 = vector.broadcast %72 : vector<8x1xf32> to vector<8x64xf32>
    %75 = vector.broadcast %73 : vector<1x64xf32> to vector<8x64xf32>
    %76 = arith.mulf %74, %75 : vector<8x64xf32>
    %77 = arith.addf %71, %76 : vector<8x64xf32>
    %78 = vector.extract_strided_slice %66 {offsets = [0, 2], sizes = [8, 1], strides = [1, 1]} : vector<8x4xf32> to vector<8x1xf32>
    %79 = vector.extract_strided_slice %65 {offsets = [4, 0], sizes = [1, 64], strides = [1, 1]} : vector<8x64xf32> to vector<1x64xf32>
    %80 = vector.broadcast %78 : vector<8x1xf32> to vector<8x64xf32>
    %81 = vector.broadcast %79 : vector<1x64xf32> to vector<8x64xf32>
    %82 = arith.mulf %80, %81 : vector<8x64xf32>
    %83 = arith.addf %77, %82 : vector<8x64xf32>
    %84 = vector.extract_strided_slice %66 {offsets = [0, 3], sizes = [8, 1], strides = [1, 1]} : vector<8x4xf32> to vector<8x1xf32>
    %85 = vector.extract_strided_slice %65 {offsets = [5, 0], sizes = [1, 64], strides = [1, 1]} : vector<8x64xf32> to vector<1x64xf32>
    %86 = vector.broadcast %84 : vector<8x1xf32> to vector<8x64xf32>
    %87 = vector.broadcast %85 : vector<1x64xf32> to vector<8x64xf32>
    %88 = arith.mulf %86, %87 : vector<8x64xf32>
    %89 = arith.addf %83, %88 : vector<8x64xf32>
    %90 = vector.extract_strided_slice %65 {offsets = [6, 0], sizes = [1, 64], strides = [1, 1]} : vector<8x64xf32> to vector<1x64xf32>
    %91 = vector.broadcast %90 : vector<1x64xf32> to vector<8x64xf32>
    %92 = arith.addf %89, %91 : vector<8x64xf32>
    %93 = vector.extract_strided_slice %65 {offsets = [0, 0], sizes = [1, 64], strides = [1, 1]} : vector<8x64xf32> to vector<1x64xf32>
    %94 = vector.extract_strided_slice %65 {offsets = [1, 0], sizes = [1, 64], strides = [1, 1]} : vector<8x64xf32> to vector<1x64xf32>
    %95 = vector.broadcast %94 : vector<1x64xf32> to vector<8x64xf32>
    %96 = arith.mulf %64, %95 : vector<8x64xf32>
    %97 = vector.broadcast %93 : vector<1x64xf32> to vector<8x64xf32>
    %98 = arith.addf %97, %96 : vector<8x64xf32>
    %99 = arith.mulf %64, %98 : vector<8x64xf32>
    %100 = arith.addf %99, %92 : vector<8x64xf32>
    %c0_44 = arith.constant 0 : index
    %c0_45 = arith.constant 0 : index
    %101 = vector.load %arg14[%c0_44, %c0_45] : memref<8x128xf32, #tpu.memory_space<vmem>>, vector<8x64xf32>
    tpu.vector_store %arg14[%c0_44, %c0_45], %57 {strides = array<i32>} : memref<8x128xf32, #tpu.memory_space<vmem>>, vector<8x64xf32>,
    %c0_46 = arith.constant 0 : index
    %c64 = arith.constant 64 : index
    %102 = vector.load %arg14[%c0_46, %c64] : memref<8x128xf32, #tpu.memory_space<vmem>>, vector<8x64xf32>
    tpu.vector_store %arg14[%c0_46, %c64], %100 {strides = array<i32>} : memref<8x128xf32, #tpu.memory_space<vmem>>, vector<8x64xf32>,
    return
  }
  func.func @transform_0(%arg0: i32) -> (i32, i32) {
    %c0_i32 = arith.constant 0 : i32
    %c0_i32_0 = arith.constant 0 : i32
    return %arg0, %c0_i32 : i32, i32
  }
  func.func @transform_1(%arg0: i32) -> (i32, i32) {
    %c0_i32 = arith.constant 0 : i32
    %c0_i32_0 = arith.constant 0 : i32
    return %arg0, %c0_i32 : i32, i32
  }
  func.func @transform_2(%arg0: i32) -> (i32, i32) {
    %c0_i32 = arith.constant 0 : i32
    %c0_i32_0 = arith.constant 0 : i32
    %c0_i32_1 = arith.constant 0 : i32
    return %c0_i32, %c0_i32_0 : i32, i32
  }
  func.func @transform_3(%arg0: i32) -> (i32, i32) {
    %c0_i32 = arith.constant 0 : i32
    %c0_i32_0 = arith.constant 0 : i32
    %c0_i32_1 = arith.constant 0 : i32
    return %c0_i32, %c0_i32_0 : i32, i32
  }
  func.func @transform_4(%arg0: i32) -> (i32, i32) {
    %c0_i32 = arith.constant 0 : i32
    %c0_i32_0 = arith.constant 0 : i32
    %c0_i32_1 = arith.constant 0 : i32
    return %c0_i32, %c0_i32_0 : i32, i32
  }
  func.func @transform_5(%arg0: i32) -> (i32, i32) {
    %c0_i32 = arith.constant 0 : i32
    %c0_i32_0 = arith.constant 0 : i32
    %c0_i32_1 = arith.constant 0 : i32
    return %c0_i32, %c0_i32_0 : i32, i32
  }
  func.func @transform_6(%arg0: i32) -> (i32, i32) {
    %c0_i32 = arith.constant 0 : i32
    %c0_i32_0 = arith.constant 0 : i32
    %c0_i32_1 = arith.constant 0 : i32
    return %c0_i32, %c0_i32_0 : i32, i32
  }
  func.func @transform_7(%arg0: i32) -> (i32, i32) {
    %c0_i32 = arith.constant 0 : i32
    %c0_i32_0 = arith.constant 0 : i32
    %c0_i32_1 = arith.constant 0 : i32
    return %c0_i32, %c0_i32_0 : i32, i32
  }
  func.func @transform_8(%arg0: i32) -> (i32, i32) {
    %c0_i32 = arith.constant 0 : i32
    %c0_i32_0 = arith.constant 0 : i32
    %c0_i32_1 = arith.constant 0 : i32
    return %c0_i32, %c0_i32_0 : i32, i32
  }
  func.func @transform_9(%arg0: i32) -> (i32, i32) {
    %c0_i32 = arith.constant 0 : i32
    %c0_i32_0 = arith.constant 0 : i32
    %c0_i32_1 = arith.constant 0 : i32
    return %c0_i32, %c0_i32_0 : i32, i32
  }
  func.func @transform_10(%arg0: i32) -> (i32, i32) {
    %c0_i32 = arith.constant 0 : i32
    %c0_i32_0 = arith.constant 0 : i32
    %c0_i32_1 = arith.constant 0 : i32
    return %c0_i32, %c0_i32_0 : i32, i32
  }
  func.func @transform_11(%arg0: i32) -> (i32, i32) {
    %c0_i32 = arith.constant 0 : i32
    %c0_i32_0 = arith.constant 0 : i32
    %c0_i32_1 = arith.constant 0 : i32
    return %c0_i32, %c0_i32_0 : i32, i32
  }
  func.func @transform_12(%arg0: i32) -> (i32, i32) {
    %c0_i32 = arith.constant 0 : i32
    %c0_i32_0 = arith.constant 0 : i32
    %c0_i32_1 = arith.constant 0 : i32
    return %c0_i32, %c0_i32_0 : i32, i32
  }
  func.func @transform_13(%arg0: i32) -> (i32, i32) {
    %c0_i32 = arith.constant 0 : i32
    %c0_i32_0 = arith.constant 0 : i32
    return %arg0, %c0_i32 : i32, i32
  }
}

module attributes {stable_mosaic.version = 11 : i64} {
  func.func @kernel(%arg0: i32, %arg1: memref<4x6xf32, #tpu.memory_space<vmem>>, %arg2: memref<4x4xf32, #tpu.memory_space<vmem>>, %arg3: memref<6x32xf32, #tpu.memory_space<vmem>>, %arg4: memref<1x32xf32, #tpu.memory_space<vmem>>, %arg5: memref<32x64xf32, #tpu.memory_space<vmem>>, %arg6: memref<1x64xf32, #tpu.memory_space<vmem>>, %arg7: memref<64x64xf32, #tpu.memory_space<vmem>>, %arg8: memref<1x64xf32, #tpu.memory_space<vmem>>, %arg9: memref<64x64xf32, #tpu.memory_space<vmem>>, %arg10: memref<1x64xf32, #tpu.memory_space<vmem>>, %arg11: memref<64x64xf32, #tpu.memory_space<vmem>>, %arg12: memref<1x64xf32, #tpu.memory_space<vmem>>, %arg13: memref<64x64xf32, #tpu.memory_space<vmem>>, %arg14: memref<1x64xf32, #tpu.memory_space<vmem>>, %arg15: memref<8x64xf32, #tpu.memory_space<vmem>>, %arg16: memref<4x128xf32, #tpu.memory_space<vmem>>) attributes {dimension_semantics = [#tpu.dimension_semantics<parallel>], iteration_bounds = array<i64: 1>, scalar_prefetch = 0 : i64, scratch_operands = 0 : i64, tpu.core_type = #tpu.core_type<tc>, window_params = [{transform_indices = @transform_0, window_bounds = array<i64: 4, 6>}, {transform_indices = @transform_1, window_bounds = array<i64: 4, 4>}, {pipeline_mode = #tpu.pipeline_mode<synchronous>, transform_indices = @transform_2, window_bounds = array<i64: 6, 32>}, {pipeline_mode = #tpu.pipeline_mode<synchronous>, transform_indices = @transform_3, window_bounds = array<i64: 1, 32>}, {pipeline_mode = #tpu.pipeline_mode<synchronous>, transform_indices = @transform_4, window_bounds = array<i64: 32, 64>}, {pipeline_mode = #tpu.pipeline_mode<synchronous>, transform_indices = @transform_5, window_bounds = array<i64: 1, 64>}, {pipeline_mode = #tpu.pipeline_mode<synchronous>, transform_indices = @transform_6, window_bounds = array<i64: 64, 64>}, {pipeline_mode = #tpu.pipeline_mode<synchronous>, transform_indices = @transform_7, window_bounds = array<i64: 1, 64>}, {pipeline_mode = #tpu.pipeline_mode<synchronous>, transform_indices = @transform_8, window_bounds = array<i64: 64, 64>}, {pipeline_mode = #tpu.pipeline_mode<synchronous>, transform_indices = @transform_9, window_bounds = array<i64: 1, 64>}, {pipeline_mode = #tpu.pipeline_mode<synchronous>, transform_indices = @transform_10, window_bounds = array<i64: 64, 64>}, {pipeline_mode = #tpu.pipeline_mode<synchronous>, transform_indices = @transform_11, window_bounds = array<i64: 1, 64>}, {pipeline_mode = #tpu.pipeline_mode<synchronous>, transform_indices = @transform_12, window_bounds = array<i64: 64, 64>}, {pipeline_mode = #tpu.pipeline_mode<synchronous>, transform_indices = @transform_13, window_bounds = array<i64: 1, 64>}, {pipeline_mode = #tpu.pipeline_mode<synchronous>, transform_indices = @transform_14, window_bounds = array<i64: 8, 64>}, {transform_indices = @transform_15, window_bounds = array<i64: 4, 128>}]} {
    %c0 = arith.constant 0 : index
    %c0_0 = arith.constant 0 : index
    %0 = vector.load %arg1[%c0, %c0_0] : memref<4x6xf32, #tpu.memory_space<vmem>>, vector<4x6xf32>
    %c0_1 = arith.constant 0 : index
    %c0_2 = arith.constant 0 : index
    %1 = vector.load %arg3[%c0_1, %c0_2] : memref<6x32xf32, #tpu.memory_space<vmem>>, vector<6x32xf32>
    %cst = arith.constant dense<0.000000e+00> : vector<4x32xf32>
    %2 = tpu.matmul %0, %1, %cst {dimension_numbers = #tpu.dot_dimension_numbers<[1], [0], [0], [1], [0, 0, 1, 1], [], []>} : vector<4x6xf32>, vector<6x32xf32>, vector<4x32xf32> -> vector<4x32xf32>
    %c0_3 = arith.constant 0 : index
    %c0_4 = arith.constant 0 : index
    %3 = vector.load %arg4[%c0_3, %c0_4] : memref<1x32xf32, #tpu.memory_space<vmem>>, vector<1x32xf32>
    %4 = vector.broadcast %3 : vector<1x32xf32> to vector<4x32xf32>
    %5 = arith.addf %2, %4 : vector<4x32xf32>
    %cst_5 = arith.constant 5.000000e-01 : f32
    %6 = vector.broadcast %cst_5 : f32 to vector<4x32xf32>
    %7 = arith.mulf %6, %5 : vector<4x32xf32>
    %8 = math.tanh %7 : vector<4x32xf32>
    %cst_6 = arith.constant 5.000000e-01 : f32
    %9 = vector.broadcast %cst_6 : f32 to vector<4x32xf32>
    %10 = arith.mulf %9, %8 : vector<4x32xf32>
    %cst_7 = arith.constant 5.000000e-01 : f32
    %11 = vector.broadcast %cst_7 : f32 to vector<4x32xf32>
    %12 = arith.addf %10, %11 : vector<4x32xf32>
    %13 = arith.mulf %5, %12 : vector<4x32xf32>
    %c0_8 = arith.constant 0 : index
    %c0_9 = arith.constant 0 : index
    %14 = vector.load %arg5[%c0_8, %c0_9] : memref<32x64xf32, #tpu.memory_space<vmem>>, vector<32x64xf32>
    %cst_10 = arith.constant dense<0.000000e+00> : vector<4x64xf32>
    %15 = tpu.matmul %13, %14, %cst_10 {dimension_numbers = #tpu.dot_dimension_numbers<[1], [0], [0], [1], [0, 0, 1, 1], [], []>} : vector<4x32xf32>, vector<32x64xf32>, vector<4x64xf32> -> vector<4x64xf32>
    %c0_11 = arith.constant 0 : index
    %c0_12 = arith.constant 0 : index
    %16 = vector.load %arg6[%c0_11, %c0_12] : memref<1x64xf32, #tpu.memory_space<vmem>>, vector<1x64xf32>
    %17 = vector.broadcast %16 : vector<1x64xf32> to vector<4x64xf32>
    %18 = arith.addf %15, %17 : vector<4x64xf32>
    %cst_13 = arith.constant 5.000000e-01 : f32
    %19 = vector.broadcast %cst_13 : f32 to vector<4x64xf32>
    %20 = arith.mulf %19, %18 : vector<4x64xf32>
    %21 = math.tanh %20 : vector<4x64xf32>
    %cst_14 = arith.constant 5.000000e-01 : f32
    %22 = vector.broadcast %cst_14 : f32 to vector<4x64xf32>
    %23 = arith.mulf %22, %21 : vector<4x64xf32>
    %cst_15 = arith.constant 5.000000e-01 : f32
    %24 = vector.broadcast %cst_15 : f32 to vector<4x64xf32>
    %25 = arith.addf %23, %24 : vector<4x64xf32>
    %26 = arith.mulf %18, %25 : vector<4x64xf32>
    %c0_16 = arith.constant 0 : index
    %c0_17 = arith.constant 0 : index
    %27 = vector.load %arg7[%c0_16, %c0_17] : memref<64x64xf32, #tpu.memory_space<vmem>>, vector<64x64xf32>
    %cst_18 = arith.constant dense<0.000000e+00> : vector<4x64xf32>
    %28 = tpu.matmul %26, %27, %cst_18 {dimension_numbers = #tpu.dot_dimension_numbers<[1], [0], [0], [1], [0, 0, 1, 1], [], []>} : vector<4x64xf32>, vector<64x64xf32>, vector<4x64xf32> -> vector<4x64xf32>
    %c0_19 = arith.constant 0 : index
    %c0_20 = arith.constant 0 : index
    %29 = vector.load %arg8[%c0_19, %c0_20] : memref<1x64xf32, #tpu.memory_space<vmem>>, vector<1x64xf32>
    %30 = vector.broadcast %29 : vector<1x64xf32> to vector<4x64xf32>
    %31 = arith.addf %28, %30 : vector<4x64xf32>
    %cst_21 = arith.constant 5.000000e-01 : f32
    %32 = vector.broadcast %cst_21 : f32 to vector<4x64xf32>
    %33 = arith.mulf %32, %31 : vector<4x64xf32>
    %34 = math.tanh %33 : vector<4x64xf32>
    %cst_22 = arith.constant 5.000000e-01 : f32
    %35 = vector.broadcast %cst_22 : f32 to vector<4x64xf32>
    %36 = arith.mulf %35, %34 : vector<4x64xf32>
    %cst_23 = arith.constant 5.000000e-01 : f32
    %37 = vector.broadcast %cst_23 : f32 to vector<4x64xf32>
    %38 = arith.addf %36, %37 : vector<4x64xf32>
    %39 = arith.mulf %31, %38 : vector<4x64xf32>
    %c0_24 = arith.constant 0 : index
    %c0_25 = arith.constant 0 : index
    %40 = vector.load %arg9[%c0_24, %c0_25] : memref<64x64xf32, #tpu.memory_space<vmem>>, vector<64x64xf32>
    %cst_26 = arith.constant dense<0.000000e+00> : vector<4x64xf32>
    %41 = tpu.matmul %39, %40, %cst_26 {dimension_numbers = #tpu.dot_dimension_numbers<[1], [0], [0], [1], [0, 0, 1, 1], [], []>} : vector<4x64xf32>, vector<64x64xf32>, vector<4x64xf32> -> vector<4x64xf32>
    %c0_27 = arith.constant 0 : index
    %c0_28 = arith.constant 0 : index
    %42 = vector.load %arg10[%c0_27, %c0_28] : memref<1x64xf32, #tpu.memory_space<vmem>>, vector<1x64xf32>
    %43 = vector.broadcast %42 : vector<1x64xf32> to vector<4x64xf32>
    %44 = arith.addf %41, %43 : vector<4x64xf32>
    %cst_29 = arith.constant 5.000000e-01 : f32
    %45 = vector.broadcast %cst_29 : f32 to vector<4x64xf32>
    %46 = arith.mulf %45, %44 : vector<4x64xf32>
    %47 = math.tanh %46 : vector<4x64xf32>
    %cst_30 = arith.constant 5.000000e-01 : f32
    %48 = vector.broadcast %cst_30 : f32 to vector<4x64xf32>
    %49 = arith.mulf %48, %47 : vector<4x64xf32>
    %cst_31 = arith.constant 5.000000e-01 : f32
    %50 = vector.broadcast %cst_31 : f32 to vector<4x64xf32>
    %51 = arith.addf %49, %50 : vector<4x64xf32>
    %52 = arith.mulf %44, %51 : vector<4x64xf32>
    %c0_32 = arith.constant 0 : index
    %c0_33 = arith.constant 0 : index
    %53 = vector.load %arg11[%c0_32, %c0_33] : memref<64x64xf32, #tpu.memory_space<vmem>>, vector<64x64xf32>
    %cst_34 = arith.constant dense<0.000000e+00> : vector<4x64xf32>
    %54 = tpu.matmul %52, %53, %cst_34 {dimension_numbers = #tpu.dot_dimension_numbers<[1], [0], [0], [1], [0, 0, 1, 1], [], []>} : vector<4x64xf32>, vector<64x64xf32>, vector<4x64xf32> -> vector<4x64xf32>
    %c0_35 = arith.constant 0 : index
    %c0_36 = arith.constant 0 : index
    %55 = vector.load %arg12[%c0_35, %c0_36] : memref<1x64xf32, #tpu.memory_space<vmem>>, vector<1x64xf32>
    %56 = vector.broadcast %55 : vector<1x64xf32> to vector<4x64xf32>
    %57 = arith.addf %54, %56 : vector<4x64xf32>
    %cst_37 = arith.constant 5.000000e-01 : f32
    %58 = vector.broadcast %cst_37 : f32 to vector<4x64xf32>
    %59 = arith.mulf %58, %57 : vector<4x64xf32>
    %60 = math.tanh %59 : vector<4x64xf32>
    %cst_38 = arith.constant 5.000000e-01 : f32
    %61 = vector.broadcast %cst_38 : f32 to vector<4x64xf32>
    %62 = arith.mulf %61, %60 : vector<4x64xf32>
    %cst_39 = arith.constant 5.000000e-01 : f32
    %63 = vector.broadcast %cst_39 : f32 to vector<4x64xf32>
    %64 = arith.addf %62, %63 : vector<4x64xf32>
    %65 = arith.mulf %57, %64 : vector<4x64xf32>
    %c0_40 = arith.constant 0 : index
    %c0_41 = arith.constant 0 : index
    %66 = vector.load %arg13[%c0_40, %c0_41] : memref<64x64xf32, #tpu.memory_space<vmem>>, vector<64x64xf32>
    %cst_42 = arith.constant dense<0.000000e+00> : vector<4x64xf32>
    %67 = tpu.matmul %65, %66, %cst_42 {dimension_numbers = #tpu.dot_dimension_numbers<[1], [0], [0], [1], [0, 0, 1, 1], [], []>} : vector<4x64xf32>, vector<64x64xf32>, vector<4x64xf32> -> vector<4x64xf32>
    %c0_43 = arith.constant 0 : index
    %c0_44 = arith.constant 0 : index
    %68 = vector.load %arg14[%c0_43, %c0_44] : memref<1x64xf32, #tpu.memory_space<vmem>>, vector<1x64xf32>
    %69 = vector.broadcast %68 : vector<1x64xf32> to vector<4x64xf32>
    %70 = arith.addf %67, %69 : vector<4x64xf32>
    %cst_45 = arith.constant 5.000000e-01 : f32
    %71 = vector.broadcast %cst_45 : f32 to vector<4x64xf32>
    %72 = arith.mulf %71, %70 : vector<4x64xf32>
    %73 = math.tanh %72 : vector<4x64xf32>
    %cst_46 = arith.constant 5.000000e-01 : f32
    %74 = vector.broadcast %cst_46 : f32 to vector<4x64xf32>
    %75 = arith.mulf %74, %73 : vector<4x64xf32>
    %cst_47 = arith.constant 5.000000e-01 : f32
    %76 = vector.broadcast %cst_47 : f32 to vector<4x64xf32>
    %77 = arith.addf %75, %76 : vector<4x64xf32>
    %c0_48 = arith.constant 0 : index
    %c0_49 = arith.constant 0 : index
    %78 = vector.load %arg15[%c0_48, %c0_49] : memref<8x64xf32, #tpu.memory_space<vmem>>, vector<8x64xf32>
    %c0_50 = arith.constant 0 : index
    %c0_51 = arith.constant 0 : index
    %79 = vector.load %arg2[%c0_50, %c0_51] : memref<4x4xf32, #tpu.memory_space<vmem>>, vector<4x4xf32>
    %80 = vector.extract_strided_slice %79 {offsets = [0, 0], sizes = [4, 1], strides = [1, 1]} : vector<4x4xf32> to vector<4x1xf32>
    %81 = vector.extract_strided_slice %78 {offsets = [2, 0], sizes = [1, 64], strides = [1, 1]} : vector<8x64xf32> to vector<1x64xf32>
    %82 = vector.broadcast %80 : vector<4x1xf32> to vector<4x64xf32>
    %83 = vector.broadcast %81 : vector<1x64xf32> to vector<4x64xf32>
    %84 = arith.mulf %82, %83 : vector<4x64xf32>
    %85 = vector.extract_strided_slice %79 {offsets = [0, 1], sizes = [4, 1], strides = [1, 1]} : vector<4x4xf32> to vector<4x1xf32>
    %86 = vector.extract_strided_slice %78 {offsets = [3, 0], sizes = [1, 64], strides = [1, 1]} : vector<8x64xf32> to vector<1x64xf32>
    %87 = vector.broadcast %85 : vector<4x1xf32> to vector<4x64xf32>
    %88 = vector.broadcast %86 : vector<1x64xf32> to vector<4x64xf32>
    %89 = arith.mulf %87, %88 : vector<4x64xf32>
    %90 = arith.addf %84, %89 : vector<4x64xf32>
    %91 = vector.extract_strided_slice %79 {offsets = [0, 2], sizes = [4, 1], strides = [1, 1]} : vector<4x4xf32> to vector<4x1xf32>
    %92 = vector.extract_strided_slice %78 {offsets = [4, 0], sizes = [1, 64], strides = [1, 1]} : vector<8x64xf32> to vector<1x64xf32>
    %93 = vector.broadcast %91 : vector<4x1xf32> to vector<4x64xf32>
    %94 = vector.broadcast %92 : vector<1x64xf32> to vector<4x64xf32>
    %95 = arith.mulf %93, %94 : vector<4x64xf32>
    %96 = arith.addf %90, %95 : vector<4x64xf32>
    %97 = vector.extract_strided_slice %79 {offsets = [0, 3], sizes = [4, 1], strides = [1, 1]} : vector<4x4xf32> to vector<4x1xf32>
    %98 = vector.extract_strided_slice %78 {offsets = [5, 0], sizes = [1, 64], strides = [1, 1]} : vector<8x64xf32> to vector<1x64xf32>
    %99 = vector.broadcast %97 : vector<4x1xf32> to vector<4x64xf32>
    %100 = vector.broadcast %98 : vector<1x64xf32> to vector<4x64xf32>
    %101 = arith.mulf %99, %100 : vector<4x64xf32>
    %102 = arith.addf %96, %101 : vector<4x64xf32>
    %103 = vector.extract_strided_slice %78 {offsets = [6, 0], sizes = [1, 64], strides = [1, 1]} : vector<8x64xf32> to vector<1x64xf32>
    %104 = vector.broadcast %103 : vector<1x64xf32> to vector<4x64xf32>
    %105 = arith.addf %102, %104 : vector<4x64xf32>
    %106 = vector.extract_strided_slice %78 {offsets = [0, 0], sizes = [1, 64], strides = [1, 1]} : vector<8x64xf32> to vector<1x64xf32>
    %107 = vector.extract_strided_slice %78 {offsets = [1, 0], sizes = [1, 64], strides = [1, 1]} : vector<8x64xf32> to vector<1x64xf32>
    %108 = vector.broadcast %107 : vector<1x64xf32> to vector<4x64xf32>
    %109 = arith.mulf %77, %108 : vector<4x64xf32>
    %110 = vector.broadcast %106 : vector<1x64xf32> to vector<4x64xf32>
    %111 = arith.addf %110, %109 : vector<4x64xf32>
    %112 = arith.mulf %77, %111 : vector<4x64xf32>
    %113 = arith.addf %112, %105 : vector<4x64xf32>
    %c0_52 = arith.constant 0 : index
    %c0_53 = arith.constant 0 : index
    %114 = vector.load %arg16[%c0_52, %c0_53] : memref<4x128xf32, #tpu.memory_space<vmem>>, vector<4x64xf32>
    tpu.vector_store %arg16[%c0_52, %c0_53], %70 {strides = array<i32>} : memref<4x128xf32, #tpu.memory_space<vmem>>, vector<4x64xf32>,
    %c0_54 = arith.constant 0 : index
    %c64 = arith.constant 64 : index
    %115 = vector.load %arg16[%c0_54, %c64] : memref<4x128xf32, #tpu.memory_space<vmem>>, vector<4x64xf32>
    tpu.vector_store %arg16[%c0_54, %c64], %113 {strides = array<i32>} : memref<4x128xf32, #tpu.memory_space<vmem>>, vector<4x64xf32>,
    return
  }
  func.func @transform_0(%arg0: i32) -> (i32, i32) {
    %c0_i32 = arith.constant 0 : i32
    %c0_i32_0 = arith.constant 0 : i32
    return %arg0, %c0_i32 : i32, i32
  }
  func.func @transform_1(%arg0: i32) -> (i32, i32) {
    %c0_i32 = arith.constant 0 : i32
    %c0_i32_0 = arith.constant 0 : i32
    return %arg0, %c0_i32 : i32, i32
  }
  func.func @transform_2(%arg0: i32) -> (i32, i32) {
    %c0_i32 = arith.constant 0 : i32
    %c0_i32_0 = arith.constant 0 : i32
    %c0_i32_1 = arith.constant 0 : i32
    return %c0_i32, %c0_i32_0 : i32, i32
  }
  func.func @transform_3(%arg0: i32) -> (i32, i32) {
    %c0_i32 = arith.constant 0 : i32
    %c0_i32_0 = arith.constant 0 : i32
    %c0_i32_1 = arith.constant 0 : i32
    return %c0_i32, %c0_i32_0 : i32, i32
  }
  func.func @transform_4(%arg0: i32) -> (i32, i32) {
    %c0_i32 = arith.constant 0 : i32
    %c0_i32_0 = arith.constant 0 : i32
    %c0_i32_1 = arith.constant 0 : i32
    return %c0_i32, %c0_i32_0 : i32, i32
  }
  func.func @transform_5(%arg0: i32) -> (i32, i32) {
    %c0_i32 = arith.constant 0 : i32
    %c0_i32_0 = arith.constant 0 : i32
    %c0_i32_1 = arith.constant 0 : i32
    return %c0_i32, %c0_i32_0 : i32, i32
  }
  func.func @transform_6(%arg0: i32) -> (i32, i32) {
    %c0_i32 = arith.constant 0 : i32
    %c0_i32_0 = arith.constant 0 : i32
    %c0_i32_1 = arith.constant 0 : i32
    return %c0_i32, %c0_i32_0 : i32, i32
  }
  func.func @transform_7(%arg0: i32) -> (i32, i32) {
    %c0_i32 = arith.constant 0 : i32
    %c0_i32_0 = arith.constant 0 : i32
    %c0_i32_1 = arith.constant 0 : i32
    return %c0_i32, %c0_i32_0 : i32, i32
  }
  func.func @transform_8(%arg0: i32) -> (i32, i32) {
    %c0_i32 = arith.constant 0 : i32
    %c0_i32_0 = arith.constant 0 : i32
    %c0_i32_1 = arith.constant 0 : i32
    return %c0_i32, %c0_i32_0 : i32, i32
  }
  func.func @transform_9(%arg0: i32) -> (i32, i32) {
    %c0_i32 = arith.constant 0 : i32
    %c0_i32_0 = arith.constant 0 : i32
    %c0_i32_1 = arith.constant 0 : i32
    return %c0_i32, %c0_i32_0 : i32, i32
  }
  func.func @transform_10(%arg0: i32) -> (i32, i32) {
    %c0_i32 = arith.constant 0 : i32
    %c0_i32_0 = arith.constant 0 : i32
    %c0_i32_1 = arith.constant 0 : i32
    return %c0_i32, %c0_i32_0 : i32, i32
  }
  func.func @transform_11(%arg0: i32) -> (i32, i32) {
    %c0_i32 = arith.constant 0 : i32
    %c0_i32_0 = arith.constant 0 : i32
    %c0_i32_1 = arith.constant 0 : i32
    return %c0_i32, %c0_i32_0 : i32, i32
  }
  func.func @transform_12(%arg0: i32) -> (i32, i32) {
    %c0_i32 = arith.constant 0 : i32
    %c0_i32_0 = arith.constant 0 : i32
    %c0_i32_1 = arith.constant 0 : i32
    return %c0_i32, %c0_i32_0 : i32, i32
  }
  func.func @transform_13(%arg0: i32) -> (i32, i32) {
    %c0_i32 = arith.constant 0 : i32
    %c0_i32_0 = arith.constant 0 : i32
    %c0_i32_1 = arith.constant 0 : i32
    return %c0_i32, %c0_i32_0 : i32, i32
  }
  func.func @transform_14(%arg0: i32) -> (i32, i32) {
    %c0_i32 = arith.constant 0 : i32
    %c0_i32_0 = arith.constant 0 : i32
    %c0_i32_1 = arith.constant 0 : i32
    return %c0_i32, %c0_i32_0 : i32, i32
  }
  func.func @transform_15(%arg0: i32) -> (i32, i32) {
    %c0_i32 = arith.constant 0 : i32
    %c0_i32_0 = arith.constant 0 : i32
    return %arg0, %c0_i32 : i32, i32
  }
}

</mosaic_0001>

<llo_original>
// kernel: model_forward.3
$region0: #{model_forward.3}
  #allocation0 [shape = 'u32[]', space=smem, size = 0x4, offset = 0x4, fixed_abs, tag = 'smem constant byte address 0x4 - core index']
  #allocation1 [shape = 'u32[72,128]{1,0:T(1,128)}', space=vmem, size = 0x9000, scoped, tag = 'internal scratch']
  %s0 = inlined_call_operand.vmem [shape: f32[64,6], index: 0, kind: input, shape index: {}]
  %s1 = inlined_call_operand.vmem [shape: f32[64,4], index: 1, kind: input, shape index: {}]
  %s2 = inlined_call_operand.vmem [shape: f32[6,32], index: 2, kind: input, shape index: {}]
  %s3 = inlined_call_operand.vmem [shape: f32[1,32], index: 3, kind: input, shape index: {}]
  %s4 = inlined_call_operand.vmem [shape: f32[32,64], index: 4, kind: input, shape index: {}]
  %s5 = inlined_call_operand.vmem [shape: f32[1,64], index: 5, kind: input, shape index: {}]
  %s6 = inlined_call_operand.vmem [shape: f32[64,64], index: 6, kind: input, shape index: {}]
  %s7 = inlined_call_operand.vmem [shape: f32[1,64], index: 7, kind: input, shape index: {}]
  %s8 = inlined_call_operand.vmem [shape: f32[64,64], index: 8, kind: input, shape index: {}]
  %s9 = inlined_call_operand.vmem [shape: f32[1,64], index: 9, kind: input, shape index: {}]
  %s10 = inlined_call_operand.vmem [shape: f32[8,64], index: 10, kind: input, shape index: {}]
  %s11 = inlined_call_operand.vmem [shape: f32[64,128], index: 11, kind: output, shape index: {}]
  %s12 = sld [smem:[#allocation0]]
  $region77: #{model_forward.3} parent=0
    _
  %s14 = ssub.s32 1, %s12
  %s15 = scalar_select 0, %s14, %s12
  loop: start=0, step=1, limit=4
  $region2: #{model_forward.3} parent=0 // loop_pre_header
    _
  $region3: #{model_forward.3} parent=0 // loop_header
    %s17 = sphi 0, %s21
    %p18 = scmp.ge.s32.totalorder %s17, 4
    %s27 = sphi 0, %s29
    %s30 = sphi 0, %s27
    %s31 = sphi 0, %s30
    %s47 = sphi 0, %s31
    %s53 = sphi 0, %s55
    %s56 = sphi 0, %s53
    %s57 = sphi 0, %s56
    %s73 = sphi 0, %s57
    %s77 = sphi 0, %s77
    %s79 = sphi 0, %s77
    %s80 = sphi 0, %s79
    %s94 = sphi 0, %s80
    %s98 = sphi 0, %s98
    %s100 = sphi 0, %s98
    %s101 = sphi 0, %s100
    %s115 = sphi 0, %s101
    %s119 = sphi 0, %s119
    %s121 = sphi 0, %s119
    %s122 = sphi 0, %s121
    %s136 = sphi 0, %s122
    %s140 = sphi 0, %s140
    %s142 = sphi 0, %s140
    %s143 = sphi 0, %s142
    %s157 = sphi 0, %s143
    %s161 = sphi 0, %s161
    %s163 = sphi 0, %s161
    %s164 = sphi 0, %s163
    %s178 = sphi 0, %s164
    %s182 = sphi 0, %s182
    %s184 = sphi 0, %s182
    %s185 = sphi 0, %s184
    %s199 = sphi 0, %s185
    %s203 = sphi 0, %s203
    %s205 = sphi 0, %s203
    %s206 = sphi 0, %s205
    %s220 = sphi 0, %s206
    %s224 = sphi 0, %s224
    %s226 = sphi 0, %s224
    %s227 = sphi 0, %s226
    %s241 = sphi 0, %s227
    %s245 = sphi 0, %s245
    %s247 = sphi 0, %s245
    %s248 = sphi 0, %s247
    %s262 = sphi 0, %s248
    %s268 = sphi 0, %s270
    %s271 = sphi 0, %s268
    %s272 = sphi 0, %s271
    %s288 = sphi 0, %s272
  $region4: #{model_forward.3} parent=0 // loop_header_branch
    %20 = sbr.rel (%p18) target = $region8
  $region5: #{model_forward.3} parent=0 // loop_body
    %s22 = ssub.s32 %s17, 1
    %s23 = ssub.s32 %s17, 2
    %s24 = sadd.s32 %s17, 1
    %s25 = ssub.s32 %s17, %s24
    %p26 = scmp.eq.s32.totalorder %s25, 0
    %s28 = sadd.s32 %s27, 1
    %s29 = scalar_select %p26, %s27, %s28
    %p32 = pneg %p26
    %p33 = scmp.eq.s32.totalorder %s17, 1
    %p34 = por %p32, %p33
    %p35 = scmp.ne.s32.totalorder %s27, %s30
    %p36 = scmp.eq.s32.totalorder %s17, 0
    %p37 = por %p35, %p36
    %p38 = scmp.ne.s32.totalorder %s27, %s30
    %p39 = scmp.eq.s32.totalorder %s22, 1
    %p40 = por %p38, %p39
    %p41 = scmp.ne.s32.totalorder %s30, %s31
    %p42 = scmp.eq.s32.totalorder %s22, 0
    %p43 = por %p41, %p42
    %p44 = scmp.ne.s32.totalorder %s30, %s31
    %p45 = scmp.eq.s32.totalorder %s23, 1
    %p46 = por %p44, %p45
    %p48 = scmp.ne.s32.totalorder %s31, %s47
    %p49 = scmp.eq.s32.totalorder %s23, 0
    %p50 = por %p48, %p49
    %s51 = ssub.s32 %s17, %s24
    %p52 = scmp.eq.s32.totalorder %s51, 0
    %s54 = sadd.s32 %s53, 1
    %s55 = scalar_select %p52, %s53, %s54
    %p58 = pneg %p52
    %p59 = scmp.eq.s32.totalorder %s17, 1
    %p60 = por %p58, %p59
    %p61 = scmp.ne.s32.totalorder %s53, %s56
    %p62 = scmp.eq.s32.totalorder %s17, 0
    %p63 = por %p61, %p62
    %p64 = scmp.ne.s32.totalorder %s53, %s56
    %p65 = scmp.eq.s32.totalorder %s22, 1
    %p66 = por %p64, %p65
    %p67 = scmp.ne.s32.totalorder %s56, %s57
    %p68 = scmp.eq.s32.totalorder %s22, 0
    %p69 = por %p67, %p68
    %p70 = scmp.ne.s32.totalorder %s56, %s57
    %p71 = scmp.eq.s32.totalorder %s23, 1
    %p72 = por %p70, %p71
    %p74 = scmp.ne.s32.totalorder %s57, %s73
    %p75 = scmp.eq.s32.totalorder %s23, 0
    %p76 = por %p74, %p75
    %s78 = sadd.s32 %s77, 1
    %p81 = scmp.eq.s32.totalorder %s17, 1
    %p82 = scmp.ne.s32.totalorder %s77, %s79
    %p83 = scmp.eq.s32.totalorder %s17, 0
    %p84 = por %p82, %p83
    %p85 = scmp.ne.s32.totalorder %s77, %s79
    %p86 = scmp.eq.s32.totalorder %s22, 1
    %p87 = por %p85, %p86
    %p88 = scmp.ne.s32.totalorder %s79, %s80
    %p89 = scmp.eq.s32.totalorder %s22, 0
    %p90 = por %p88, %p89
    %p91 = scmp.ne.s32.totalorder %s79, %s80
    %p92 = scmp.eq.s32.totalorder %s23, 1
    %p93 = por %p91, %p92
    %p95 = scmp.ne.s32.totalorder %s80, %s94
    %p96 = scmp.eq.s32.totalorder %s23, 0
    %p97 = por %p95, %p96
    %s99 = sadd.s32 %s98, 1
    %p102 = scmp.eq.s32.totalorder %s17, 1
    %p103 = scmp.ne.s32.totalorder %s98, %s100
    %p104 = scmp.eq.s32.totalorder %s17, 0
    %p105 = por %p103, %p104
    %p106 = scmp.ne.s32.totalorder %s98, %s100
    %p107 = scmp.eq.s32.totalorder %s22, 1
    %p108 = por %p106, %p107
    %p109 = scmp.ne.s32.totalorder %s100, %s101
    %p110 = scmp.eq.s32.totalorder %s22, 0
    %p111 = por %p109, %p110
    %p112 = scmp.ne.s32.totalorder %s100, %s101
    %p113 = scmp.eq.s32.totalorder %s23, 1
    %p114 = por %p112, %p113
    %p116 = scmp.ne.s32.totalorder %s101, %s115
    %p117 = scmp.eq.s32.totalorder %s23, 0
    %p118 = por %p116, %p117
    %s120 = sadd.s32 %s119, 1
    %p123 = scmp.eq.s32.totalorder %s17, 1
    %p124 = scmp.ne.s32.totalorder %s119, %s121
    %p125 = scmp.eq.s32.totalorder %s17, 0
    %p126 = por %p124, %p125
    %p127 = scmp.ne.s32.totalorder %s119, %s121
    %p128 = scmp.eq.s32.totalorder %s22, 1
    %p129 = por %p127, %p128
    %p130 = scmp.ne.s32.totalorder %s121, %s122
    %p131 = scmp.eq.s32.totalorder %s22, 0
    %p132 = por %p130, %p131
    %p133 = scmp.ne.s32.totalorder %s121, %s122
    %p134 = scmp.eq.s32.totalorder %s23, 1
    %p135 = por %p133, %p134
    %p137 = scmp.ne.s32.totalorder %s122, %s136
    %p138 = scmp.eq.s32.totalorder %s23, 0
    %p139 = por %p137, %p138
    %s141 = sadd.s32 %s140, 1
    %p144 = scmp.eq.s32.totalorder %s17, 1
    %p145 = scmp.ne.s32.totalorder %s140, %s142
    %p146 = scmp.eq.s32.totalorder %s17, 0
    %p147 = por %p145, %p146
    %p148 = scmp.ne.s32.totalorder %s140, %s142
    %p149 = scmp.eq.s32.totalorder %s22, 1
    %p150 = por %p148, %p149
    %p151 = scmp.ne.s32.totalorder %s142, %s143
    %p152 = scmp.eq.s32.totalorder %s22, 0
    %p153 = por %p151, %p152
    %p154 = scmp.ne.s32.totalorder %s142, %s143
    %p155 = scmp.eq.s32.totalorder %s23, 1
    %p156 = por %p154, %p155
    %p158 = scmp.ne.s32.totalorder %s143, %s157
    %p159 = scmp.eq.s32.totalorder %s23, 0
    %p160 = por %p158, %p159
    %s162 = sadd.s32 %s161, 1
    %p165 = scmp.eq.s32.totalorder %s17, 1
    %p166 = scmp.ne.s32.totalorder %s161, %s163
    %p167 = scmp.eq.s32.totalorder %s17, 0
    %p168 = por %p166, %p167
    %p169 = scmp.ne.s32.totalorder %s161, %s163
    %p170 = scmp.eq.s32.totalorder %s22, 1
    %p171 = por %p169, %p170
    %p172 = scmp.ne.s32.totalorder %s163, %s164
    %p173 = scmp.eq.s32.totalorder %s22, 0
    %p174 = por %p172, %p173
    %p175 = scmp.ne.s32.totalorder %s163, %s164
    %p176 = scmp.eq.s32.totalorder %s23, 1
    %p177 = por %p175, %p176
    %p179 = scmp.ne.s32.totalorder %s164, %s178
    %p180 = scmp.eq.s32.totalorder %s23, 0
    %p181 = por %p179, %p180
    %s183 = sadd.s32 %s182, 1
    %p186 = scmp.eq.s32.totalorder %s17, 1
    %p187 = scmp.ne.s32.totalorder %s182, %s184
    %p188 = scmp.eq.s32.totalorder %s17, 0
    %p189 = por %p187, %p188
    %p190 = scmp.ne.s32.totalorder %s182, %s184
    %p191 = scmp.eq.s32.totalorder %s22, 1
    %p192 = por %p190, %p191
    %p193 = scmp.ne.s32.totalorder %s184, %s185
    %p194 = scmp.eq.s32.totalorder %s22, 0
    %p195 = por %p193, %p194
    %p196 = scmp.ne.s32.totalorder %s184, %s185
    %p197 = scmp.eq.s32.totalorder %s23, 1
    %p198 = por %p196, %p197
    %p200 = scmp.ne.s32.totalorder %s185, %s199
    %p201 = scmp.eq.s32.totalorder %s23, 0
    %p202 = por %p200, %p201
    %s204 = sadd.s32 %s203, 1
    %p207 = scmp.eq.s32.totalorder %s17, 1
    %p208 = scmp.ne.s32.totalorder %s203, %s205
    %p209 = scmp.eq.s32.totalorder %s17, 0
    %p210 = por %p208, %p209
    %p211 = scmp.ne.s32.totalorder %s203, %s205
    %p212 = scmp.eq.s32.totalorder %s22, 1
    %p213 = por %p211, %p212
    %p214 = scmp.ne.s32.totalorder %s205, %s206
    %p215 = scmp.eq.s32.totalorder %s22, 0
    %p216 = por %p214, %p215
    %p217 = scmp.ne.s32.totalorder %s205, %s206
    %p218 = scmp.eq.s32.totalorder %s23, 1
    %p219 = por %p217, %p218
    %p221 = scmp.ne.s32.totalorder %s206, %s220
    %p222 = scmp.eq.s32.totalorder %s23, 0
    %p223 = por %p221, %p222
    %s225 = sadd.s32 %s224, 1
    %p228 = scmp.eq.s32.totalorder %s17, 1
    %p229 = scmp.ne.s32.totalorder %s224, %s226
    %p230 = scmp.eq.s32.totalorder %s17, 0
    %p231 = por %p229, %p230
    %p232 = scmp.ne.s32.totalorder %s224, %s226
    %p233 = scmp.eq.s32.totalorder %s22, 1
    %p234 = por %p232, %p233
    %p235 = scmp.ne.s32.totalorder %s226, %s227
    %p236 = scmp.eq.s32.totalorder %s22, 0
    %p237 = por %p235, %p236
    %p238 = scmp.ne.s32.totalorder %s226, %s227
    %p239 = scmp.eq.s32.totalorder %s23, 1
    %p240 = por %p238, %p239
    %p242 = scmp.ne.s32.totalorder %s227, %s241
    %p243 = scmp.eq.s32.totalorder %s23, 0
    %p244 = por %p242, %p243
    %s246 = sadd.s32 %s245, 1
    %p249 = scmp.eq.s32.totalorder %s17, 1
    %p250 = scmp.ne.s32.totalorder %s245, %s247
    %p251 = scmp.eq.s32.totalorder %s17, 0
    %p252 = por %p250, %p251
    %p253 = scmp.ne.s32.totalorder %s245, %s247
    %p254 = scmp.eq.s32.totalorder %s22, 1
    %p255 = por %p253, %p254
    %p256 = scmp.ne.s32.totalorder %s247, %s248
    %p257 = scmp.eq.s32.totalorder %s22, 0
    %p258 = por %p256, %p257
    %p259 = scmp.ne.s32.totalorder %s247, %s248
    %p260 = scmp.eq.s32.totalorder %s23, 1
    %p261 = por %p259, %p260
    %p263 = scmp.ne.s32.totalorder %s248, %s262
    %p264 = scmp.eq.s32.totalorder %s23, 0
    %p265 = por %p263, %p264
    %s266 = ssub.s32 %s17, %s24
    %p267 = scmp.eq.s32.totalorder %s266, 0
    %s269 = sadd.s32 %s268, 1
    %s270 = scalar_select %p267, %s268, %s269
    %p273 = pneg %p267
    %p274 = scmp.eq.s32.totalorder %s17, 1
    %p275 = por %p273, %p274
    %p276 = scmp.ne.s32.totalorder %s268, %s271
    %p277 = scmp.eq.s32.totalorder %s17, 0
    %p278 = por %p276, %p277
    %p279 = scmp.ne.s32.totalorder %s268, %s271
    %p280 = scmp.eq.s32.totalorder %s22, 1
    %p281 = por %p279, %p280
    %p282 = scmp.ne.s32.totalorder %s271, %s272
    %p283 = scmp.eq.s32.totalorder %s22, 0
    %p284 = por %p282, %p283
    %p285 = scmp.ne.s32.totalorder %s271, %s272
    %p286 = scmp.eq.s32.totalorder %s23, 1
    %p287 = por %p285, %p286
    %p289 = scmp.ne.s32.totalorder %s272, %s288
    %p290 = scmp.eq.s32.totalorder %s23, 0
    %p291 = por %p289, %p290
    %p292 = scmp.le.s32.totalorder 1, %s17
    %p293 = scmp.lt.s32.totalorder %s17, 3
    %p294 = pnand %p292, %p293
    %p295 = pneg %p294
    // Predicated region
    $region9: #{model_forward.3} parent=5 // pred_check
      _
    $region10: #{model_forward.3} parent=5 // pred_check_branch
      %297 = sbr.rel (%p294) target = $region12
    $region11: #{model_forward.3} parent=5 // pred_region
      %s298 = ssub.s32 %s17, 1
      // Predicated region
      $region13: #{model_forward.3} parent=11 // pred_check
        %p299 = pneg %p90
      $region14: #{model_forward.3} parent=11 // pred_check_branch
        %301 = sbr.rel (%p299) target = $region16
      $region15: #{model_forward.3} parent=11 // pred_region
        _
      $region16: #{model_forward.3} parent=11 // pred_fallthru
        _
      // Predicated region
      $region17: #{model_forward.3} parent=11 // pred_check
        %p302 = pneg %p111
      $region18: #{model_forward.3} parent=11 // pred_check_branch
        %304 = sbr.rel (%p302) target = $region20
      $region19: #{model_forward.3} parent=11 // pred_region
        _
      $region20: #{model_forward.3} parent=11 // pred_fallthru
        _
      // Predicated region
      $region21: #{model_forward.3} parent=11 // pred_check
        %p305 = pneg %p132
      $region22: #{model_forward.3} parent=11 // pred_check_branch
        %307 = sbr.rel (%p305) target = $region24
      $region23: #{model_forward.3} parent=11 // pred_region
        _
      $region24: #{model_forward.3} parent=11 // pred_fallthru
        _
      // Predicated region
      $region25: #{model_forward.3} parent=11 // pred_check
        %p308 = pneg %p153
      $region26: #{model_forward.3} parent=11 // pred_check_branch
        %310 = sbr.rel (%p308) target = $region28
      $region27: #{model_forward.3} parent=11 // pred_region
        _
      $region28: #{model_forward.3} parent=11 // pred_fallthru
        _
      // Predicated region
      $region29: #{model_forward.3} parent=11 // pred_check
        %p311 = pneg %p174
      $region30: #{model_forward.3} parent=11 // pred_check_branch
        %313 = sbr.rel (%p311) target = $region32
      $region31: #{model_forward.3} parent=11 // pred_region
        _
      $region32: #{model_forward.3} parent=11 // pred_fallthru
        _
      // Predicated region
      $region33: #{model_forward.3} parent=11 // pred_check
        %p314 = pneg %p195
      $region34: #{model_forward.3} parent=11 // pred_check_branch
        %316 = sbr.rel (%p314) target = $region36
      $region35: #{model_forward.3} parent=11 // pred_region
        _
      $region36: #{model_forward.3} parent=11 // pred_fallthru
        _
      // Predicated region
      $region37: #{model_forward.3} parent=11 // pred_check
        %p317 = pneg %p216
      $region38: #{model_forward.3} parent=11 // pred_check_branch
        %319 = sbr.rel (%p317) target = $region40
      $region39: #{model_forward.3} parent=11 // pred_region
        _
      $region40: #{model_forward.3} parent=11 // pred_fallthru
        _
      // Predicated region
      $region41: #{model_forward.3} parent=11 // pred_check
        %p320 = pneg %p237
      $region42: #{model_forward.3} parent=11 // pred_check_branch
        %322 = sbr.rel (%p320) target = $region44
      $region43: #{model_forward.3} parent=11 // pred_region
        _
      $region44: #{model_forward.3} parent=11 // pred_fallthru
        _
      // Predicated region
      $region45: #{model_forward.3} parent=11 // pred_check
        %p323 = pneg %p258
      $region46: #{model_forward.3} parent=11 // pred_check_branch
        %325 = sbr.rel (%p323) target = $region48
      $region47: #{model_forward.3} parent=11 // pred_region
        _
      $region48: #{model_forward.3} parent=11 // pred_fallthru
        _
    $region12: #{model_forward.3} parent=5 // pred_fallthru
      _
    %p326 = scmp.lt.s32.totalorder %s17, 2
    // Predicated region
    $region49: #{model_forward.3} parent=5 // pred_check
      %p327 = pneg %p326
    $region50: #{model_forward.3} parent=5 // pred_check_branch
      %329 = sbr.rel (%p327) target = $region52
    $region51: #{model_forward.3} parent=5 // pred_region
      // Predicated region
      $region53: #{model_forward.3} parent=51 // pred_check
        %p330 = pneg %p37
      $region54: #{model_forward.3} parent=51 // pred_check_branch
        %332 = sbr.rel (%p330) target = $region56
      $region55: #{model_forward.3} parent=51 // pred_region
        %s333 = smul.u32 4, %s17
        %p334 = scmp.lt.s32.totalorder %s333, 7
        %s335 = scalar_select %p334, %s333, 7
        %s336 = smul.addr %s335, 8
        %s337 = scalar_lea.vmem %s0, %s336
        %s338 = smul.u32 4, %s17
      $region56: #{model_forward.3} parent=51 // pred_fallthru
        _
      // Predicated region
      $region57: #{model_forward.3} parent=51 // pred_check
        %p339 = pneg %p63
      $region58: #{model_forward.3} parent=51 // pred_check_branch
        %341 = sbr.rel (%p339) target = $region60
      $region59: #{model_forward.3} parent=51 // pred_region
        %s342 = smul.u32 4, %s17
        %p343 = scmp.lt.s32.totalorder %s342, 7
        %s344 = scalar_select %p343, %s342, 7
        %s345 = smul.addr %s344, 8
        %s346 = scalar_lea.vmem %s1, %s345
        %s347 = smul.u32 4, %s17
      $region60: #{model_forward.3} parent=51 // pred_fallthru
        _
    $region52: #{model_forward.3} parent=5 // pred_fallthru
      _
    %p348 = scmp.le.s32.totalorder 1, %s17
    %p349 = scmp.lt.s32.totalorder %s17, 3
    %p350 = pnand %p348, %p349
    %p351 = pneg %p350
    // Predicated region
    $region61: #{model_forward.3} parent=5 // pred_check
      _
    $region62: #{model_forward.3} parent=5 // pred_check_branch
      %353 = sbr.rel (%p350) target = $region64
    $region63: #{model_forward.3} parent=5 // pred_region
      %s354 = ssub.s32 %s17, 1
      %s355 = smul.u32 4, %s22
      %p356 = scmp.lt.s32.totalorder %s355, 7
      %s357 = scalar_select %p356, %s355, 7
      %s358 = smul.addr %s357, 8
      %s359 = scalar_lea.vmem %s0, %s358
      %p360 = pneg %p43
      %p361 = pneg %p40
      %s362 = smul.u32 4, %s22
      %p363 = scmp.lt.s32.totalorder %s362, 7
      %s364 = scalar_select %p363, %s362, 7
      %s365 = smul.addr %s364, 8
      %s366 = scalar_lea.vmem %s1, %s365
      %p367 = pneg %p69
      %p368 = pneg %p66
      %p369 = pneg %p90
      %p370 = pneg %p87
      %p371 = pneg %p111
      %p372 = pneg %p108
      %p373 = pneg %p132
      %p374 = pneg %p129
      %p375 = pneg %p153
      %p376 = pneg %p150
      %p377 = pneg %p174
      %p378 = pneg %p171
      %p379 = pneg %p195
      %p380 = pneg %p192
      %p381 = pneg %p216
      %p382 = pneg %p213
      %p383 = pneg %p237
      %p384 = pneg %p234
      %p385 = pneg %p258
      %p386 = pneg %p255
      %p387 = pneg %p284
      %p388 = pneg %p281
      %s389 = smul.u32 4, %s22
      %p390 = scmp.lt.s32.totalorder %s389, 7
      %s391 = scalar_select %p390, %s389, 7
      %s392 = smul.addr %s391, 8
      %s393 = scalar_lea.vmem %s11, %s392
      %s394 = smul.u32 4, %s22
      %p395 = scmp.lt.s32.totalorder %s394, 7
      %s396 = scalar_select %p395, %s394, 7
      %s397 = smul.addr %s396, 8
      %s398 = scalar_lea.vmem %s0, %s397
      %s399 = smul.u32 4, %s22
      %s400 = smul.u32 4, %s22
      %p401 = scmp.lt.s32.totalorder %s400, 7
      %s402 = scalar_select %p401, %s400, 7
      %s403 = smul.addr %s402, 8
      %s404 = scalar_lea.vmem %s1, %s403
      %s405 = smul.u32 4, %s22
      %s406 = smul.u32 4, %s22
      %p407 = scmp.lt.s32.totalorder %s406, 7
      %s408 = scalar_select %p407, %s406, 7
      %s409 = smul.addr %s408, 8
      %s410 = scalar_lea.vmem %s11, %s409
      %s411 = smul.u32 4, %s22
      %v412 = vld [vmem:[%s398] sm:$0xff]
      %v413 = vld [vmem:[%s398 + $0x8] sm:$0xff]
      %v414 = vld [vmem:[%s398 + $0x10] sm:$0xff]
      %v415 = vld [vmem:[%s398 + $0x18] sm:$0xff]
      %v416 = vld [vmem:[%s2] sm:$0x3f]
      %v417 = vld [vmem:[%s3] sm:$0x1]
      %v419 = vperm.slane %v417, 0
      %vm421 = vcmask 48128
      %v423 = vsel %vm421, %v412, 0
      %v426 = vsel %vm421, %v413, 0
      %v429 = vsel %vm421, %v414, 0
      %v432 = vsel %vm421, %v415, 0
      %vm434 = vcmask 1045504
      %v436 = vsel %vm434, %v416, 0
      %438 = vmatpush.msra.mxu0 0.0
      %439 = vmatpush.msra.mxu0 0.0
      %440 = vmatpush.msra.mxu0 0.0
      %441 = vmatpush.msra.mxu0 0.0
      %442 = vmatpush.msra.mxu0 0.0
      %443 = vmatpush.msra.mxu0 0.0
      %444 = vmatpush.msra.mxu0 0.0
      %445 = vmatpush.msra.mxu0 0.0
      %446 = vmatpush.msra.mxu0 0.0
      %447 = vmatpush.msra.mxu0 0.0
      %448 = vmatpush.msra.mxu0 0.0
      %449 = vmatpush.msra.mxu0 0.0
      %450 = vmatpush.msra.mxu0 0.0
      %451 = vmatpush.msra.mxu0 0.0
      %452 = vmatpush.msra.mxu0 0.0
      %453 = vmatpush.msra.mxu0 %v436
      %454 = vmatmul.f32.gmra.mxu0 %v423
      %v455 = vpop.f32.mrf.mxu0
      %v456 = vadd.f32 %v419, %v455
      %457 = vmatmul.f32.gmra.mxu0 %v426
      %v458 = vpop.f32.mrf.mxu0
      %v459 = vadd.f32 %v419, %v458
      %460 = vmatmul.f32.gmra.mxu0 %v429
      %v461 = vpop.f32.mrf.mxu0
      %v462 = vadd.f32 %v419, %v461
      %463 = vmatmul.f32.gmra.mxu0 %v432
      %v464 = vpop.f32.mrf.mxu0
      %v465 = vadd.f32 %v419, %v464
      %466 = vdwg.mxu0
      %v467 = vmul.f32 %v456, 0.5
      %v468 = vmul.f32 %v459, 0.5
      %v469 = vmul.f32 %v462, 0.5
      %v470 = vmul.f32 %v465, 0.5
      %v471 = vtanh.pop %v467
      %v472 = vtanh.pop %v468
      %v473 = vtanh.pop %v469
      %v474 = vtanh.pop %v470
      %v475 = vmul.f32 %v471, 0.5
      %v476 = vmul.f32 %v472, 0.5
      %v477 = vmul.f32 %v473, 0.5
      %v478 = vmul.f32 %v474, 0.5
      %v479 = vadd.f32 %v475, 0.5
      %v480 = vadd.f32 %v476, 0.5
      %v481 = vadd.f32 %v477, 0.5
      %v482 = vadd.f32 %v478, 0.5
      %v483 = vmul.f32 %v456, %v479
      %v484 = vmul.f32 %v459, %v480
      %v485 = vmul.f32 %v462, %v481
      %v486 = vmul.f32 %v465, %v482
      %v487 = vld [vmem:[%s4] sm:$0xff]
      %v488 = vld [vmem:[%s4 + $0x8] sm:$0xff]
      %v489 = vld [vmem:[%s4 + $0x10] sm:$0xff]
      %v490 = vld [vmem:[%s4 + $0x18] sm:$0xff]
      %v491 = vld [vmem:[%s5] sm:$0x1]
      %v493 = vperm.slane %v491, 0
      %vm495 = vcmask 261120
      %v497 = vsel %vm495, %v483, 0
      %v500 = vsel %vm495, %v484, 0
      %v503 = vsel %vm495, %v485, 0
      %v506 = vsel %vm495, %v486, 0
      %508 = vmatpush.msra.mxu0 0.0
      %509 = vmatpush.msra.mxu0 0.0
      %510 = vmatpush.msra.mxu0 0.0
      %511 = vmatpush.msra.mxu0 0.0
      %512 = vmatpush.msra.mxu0 0.0
      %513 = vmatpush.msra.mxu0 0.0
      %514 = vmatpush.msra.mxu0 0.0
      %515 = vmatpush.msra.mxu0 0.0
      %516 = vmatpush.msra.mxu0 0.0
      %517 = vmatpush.msra.mxu0 0.0
      %518 = vmatpush.msra.mxu0 0.0
      %519 = vmatpush.msra.mxu0 0.0
      %520 = vmatpush.msra.mxu0 %v490
      %521 = vmatpush.msra.mxu0 %v489
      %522 = vmatpush.msra.mxu0 %v488
      %523 = vmatpush.msra.mxu0 %v487
      %524 = vmatmul.f32.gmra.mxu0 %v497
      %v525 = vpop.f32.mrf.mxu0
      %v526 = vadd.f32 %v493, %v525
      %527 = vmatmul.f32.gmra.mxu0 %v500
      %v528 = vpop.f32.mrf.mxu0
      %v529 = vadd.f32 %v493, %v528
      %530 = vmatmul.f32.gmra.mxu0 %v503
      %v531 = vpop.f32.mrf.mxu0
      %v532 = vadd.f32 %v493, %v531
      %533 = vmatmul.f32.gmra.mxu0 %v506
      %v534 = vpop.f32.mrf.mxu0
      %v535 = vadd.f32 %v493, %v534
      %536 = vdwg.mxu0
      %v537 = vmul.f32 %v526, 0.5
      %v538 = vmul.f32 %v529, 0.5
      %v539 = vmul.f32 %v532, 0.5
      %v540 = vmul.f32 %v535, 0.5
      %v541 = vtanh.pop %v537
      %v542 = vtanh.pop %v538
      %v543 = vtanh.pop %v539
      %v544 = vtanh.pop %v540
      %v545 = vmul.f32 %v541, 0.5
      %v546 = vmul.f32 %v542, 0.5
      %v547 = vmul.f32 %v543, 0.5
      %v548 = vmul.f32 %v544, 0.5
      %v549 = vadd.f32 %v545, 0.5
      %v550 = vadd.f32 %v546, 0.5
      %v551 = vadd.f32 %v547, 0.5
      %v552 = vadd.f32 %v548, 0.5
      %v553 = vmul.f32 %v526, %v549
      %v554 = vmul.f32 %v529, %v550
      %v555 = vmul.f32 %v532, %v551
      %v556 = vmul.f32 %v535, %v552
      %v557 = vld [vmem:[%s6] sm:$0xff]
      %v558 = vld [vmem:[%s6 + $0x8] sm:$0xff]
      %v559 = vld [vmem:[%s6 + $0x10] sm:$0xff]
      %v560 = vld [vmem:[%s6 + $0x18] sm:$0xff]
      %v561 = vld [vmem:[%s6 + $0x20] sm:$0xff]
      %v562 = vld [vmem:[%s6 + $0x28] sm:$0xff]
      %v563 = vld [vmem:[%s6 + $0x30] sm:$0xff]
      %v564 = vld [vmem:[%s6 + $0x38] sm:$0xff]
      %v565 = vld [vmem:[%s7] sm:$0x1]
      %v567 = vperm.slane %v565, 0
      %vm569 = vcmask 523264
      %v571 = vsel %vm569, %v553, 0
      %v574 = vsel %vm569, %v554, 0
      %v577 = vsel %vm569, %v555, 0
      %v580 = vsel %vm569, %v556, 0
      %582 = vmatpush.msra.mxu0 0.0
      %583 = vmatpush.msra.mxu0 0.0
      %584 = vmatpush.msra.mxu0 0.0
      %585 = vmatpush.msra.mxu0 0.0
      %586 = vmatpush.msra.mxu0 0.0
      %587 = vmatpush.msra.mxu0 0.0
      %588 = vmatpush.msra.mxu0 0.0
      %589 = vmatpush.msra.mxu0 0.0
      %590 = vmatpush.msra.mxu0 %v564
      %591 = vmatpush.msra.mxu0 %v563
      %592 = vmatpush.msra.mxu0 %v562
      %593 = vmatpush.msra.mxu0 %v561
      %594 = vmatpush.msra.mxu0 %v560
      %595 = vmatpush.msra.mxu0 %v559
      %596 = vmatpush.msra.mxu0 %v558
      %597 = vmatpush.msra.mxu0 %v557
      %598 = vmatmul.f32.gmra.mxu0 %v571
      %v599 = vpop.f32.mrf.mxu0
      %v600 = vadd.f32 %v567, %v599
      %601 = vmatmul.f32.gmra.mxu0 %v574
      %v602 = vpop.f32.mrf.mxu0
      %v603 = vadd.f32 %v567, %v602
      %604 = vmatmul.f32.gmra.mxu0 %v577
      %v605 = vpop.f32.mrf.mxu0
      %v606 = vadd.f32 %v567, %v605
      %607 = vmatmul.f32.gmra.mxu0 %v580
      %v608 = vpop.f32.mrf.mxu0
      %v609 = vadd.f32 %v567, %v608
      %610 = vdwg.mxu0
      %v611 = vmul.f32 %v600, 0.5
      %v612 = vmul.f32 %v603, 0.5
      %v613 = vmul.f32 %v606, 0.5
      %v614 = vmul.f32 %v609, 0.5
      %v615 = vtanh.pop %v611
      %v616 = vtanh.pop %v612
      %v617 = vtanh.pop %v613
      %v618 = vtanh.pop %v614
      %v619 = vmul.f32 %v615, 0.5
      %v620 = vmul.f32 %v616, 0.5
      %v621 = vmul.f32 %v617, 0.5
      %v622 = vmul.f32 %v618, 0.5
      %v623 = vadd.f32 %v619, 0.5
      %v624 = vadd.f32 %v620, 0.5
      %v625 = vadd.f32 %v621, 0.5
      %v626 = vadd.f32 %v622, 0.5
      %v627 = vmul.f32 %v600, %v623
      %v628 = vmul.f32 %v603, %v624
      %v629 = vmul.f32 %v606, %v625
      %v630 = vmul.f32 %v609, %v626
      %v631 = vld [vmem:[%s8] sm:$0xff]
      %v632 = vld [vmem:[%s8 + $0x8] sm:$0xff]
      %v633 = vld [vmem:[%s8 + $0x10] sm:$0xff]
      %v634 = vld [vmem:[%s8 + $0x18] sm:$0xff]
      %v635 = vld [vmem:[%s8 + $0x20] sm:$0xff]
      %v636 = vld [vmem:[%s8 + $0x28] sm:$0xff]
      %v637 = vld [vmem:[%s8 + $0x30] sm:$0xff]
      %v638 = vld [vmem:[%s8 + $0x38] sm:$0xff]
      %v639 = vld [vmem:[%s9] sm:$0x1]
      %v641 = vperm.slane %v639, 0
      %v644 = vsel %vm569, %v627, 0
      %v647 = vsel %vm569, %v628, 0
      %v650 = vsel %vm569, %v629, 0
      %v653 = vsel %vm569, %v630, 0
      %655 = vmatpush.msra.mxu0 0.0
      %656 = vmatpush.msra.mxu0 0.0
      %657 = vmatpush.msra.mxu0 0.0
      %658 = vmatpush.msra.mxu0 0.0
      %659 = vmatpush.msra.mxu0 0.0
      %660 = vmatpush.msra.mxu0 0.0
      %661 = vmatpush.msra.mxu0 0.0
      %662 = vmatpush.msra.mxu0 0.0
      %663 = vmatpush.msra.mxu0 %v638
      %664 = vmatpush.msra.mxu0 %v637
      %665 = vmatpush.msra.mxu0 %v636
      %666 = vmatpush.msra.mxu0 %v635
      %667 = vmatpush.msra.mxu0 %v634
      %668 = vmatpush.msra.mxu0 %v633
      %669 = vmatpush.msra.mxu0 %v632
      %670 = vmatpush.msra.mxu0 %v631
      %671 = vmatmul.f32.gmra.mxu0 %v644
      %v672 = vpop.f32.mrf.mxu0
      %v673 = vadd.f32 %v641, %v672
      %674 = vmatmul.f32.gmra.mxu0 %v647
      %v675 = vpop.f32.mrf.mxu0
      %v676 = vadd.f32 %v641, %v675
      %677 = vmatmul.f32.gmra.mxu0 %v650
      %v678 = vpop.f32.mrf.mxu0
      %v679 = vadd.f32 %v641, %v678
      %680 = vmatmul.f32.gmra.mxu0 %v653
      %v681 = vpop.f32.mrf.mxu0
      %v682 = vadd.f32 %v641, %v681
      %683 = vdwg.mxu0
      %v684 = vmul.f32 %v673, 0.5
      %v685 = vmul.f32 %v676, 0.5
      %v686 = vmul.f32 %v679, 0.5
      %v687 = vmul.f32 %v682, 0.5
      %v688 = vtanh.pop %v684
      %v689 = vtanh.pop %v685
      %v690 = vtanh.pop %v686
      %v691 = vtanh.pop %v687
      %v692 = vmul.f32 %v688, 0.5
      %v693 = vmul.f32 %v689, 0.5
      %v694 = vmul.f32 %v690, 0.5
      %v695 = vmul.f32 %v691, 0.5
      %v696 = vadd.f32 %v692, 0.5
      %v697 = vadd.f32 %v693, 0.5
      %v698 = vadd.f32 %v694, 0.5
      %v699 = vadd.f32 %v695, 0.5
      %v700 = vld [vmem:[%s10] sm:$0xff]
      %v701 = vld [vmem:[%s404] sm:$0xff]
      %v702 = vld [vmem:[%s404 + $0x8] sm:$0xff]
      %v703 = vld [vmem:[%s404 + $0x10] sm:$0xff]
      %v704 = vld [vmem:[%s404 + $0x18] sm:$0xff]
      %706 = vset.pattern.permute.xlu0 0
      %707 = vperm.xlu0 %706, %v701
      %v708 = vpop.permute.xlu0 %707
      %711 = vset.pattern.permute.xlu0 0
      %712 = vperm.xlu0 %711, %v702
      %v713 = vpop.permute.xlu0 %712
      %716 = vset.pattern.permute.xlu0 0
      %717 = vperm.xlu0 %716, %v703
      %v718 = vpop.permute.xlu0 %717
      %721 = vset.pattern.permute.xlu0 0
      %722 = vperm.xlu0 %721, %v704
      %v723 = vpop.permute.xlu0 %722
      %v725 = vperm.slane %v700, 2
      %v726 = vmul.f32 %v708, %v725
      %v727 = vmul.f32 %v713, %v725
      %v728 = vmul.f32 %v718, %v725
      %v729 = vmul.f32 %v723, %v725
      %730 = vset.pattern.permute.xlu0 1
      %731 = vperm.xlu0 %730, %v701
      %v732 = vpop.permute.xlu0 %731
      %734 = vset.pattern.permute.xlu0 1
      %735 = vperm.xlu0 %734, %v702
      %v736 = vpop.permute.xlu0 %735
      %738 = vset.pattern.permute.xlu0 1
      %739 = vperm.xlu0 %738, %v703
      %v740 = vpop.permute.xlu0 %739
      %742 = vset.pattern.permute.xlu0 1
      %743 = vperm.xlu0 %742, %v704
      %v744 = vpop.permute.xlu0 %743
      %v746 = vperm.slane %v700, 3
      %v747 = vmul.f32 %v732, %v746
      %v748 = vmul.f32 %v736, %v746
      %v749 = vmul.f32 %v740, %v746
      %v750 = vmul.f32 %v744, %v746
      %v751 = vadd.f32 %v726, %v747
      %v752 = vadd.f32 %v727, %v748
      %v753 = vadd.f32 %v728, %v749
      %v754 = vadd.f32 %v729, %v750
      %755 = vset.pattern.permute.xlu0 2
      %756 = vperm.xlu0 %755, %v701
      %v757 = vpop.permute.xlu0 %756
      %759 = vset.pattern.permute.xlu0 2
      %760 = vperm.xlu0 %759, %v702
      %v761 = vpop.permute.xlu0 %760
      %763 = vset.pattern.permute.xlu0 2
      %764 = vperm.xlu0 %763, %v703
      %v765 = vpop.permute.xlu0 %764
      %767 = vset.pattern.permute.xlu0 2
      %768 = vperm.xlu0 %767, %v704
      %v769 = vpop.permute.xlu0 %768
      %v771 = vperm.slane %v700, 4
      %v772 = vmul.f32 %v757, %v771
      %v773 = vmul.f32 %v761, %v771
      %v774 = vmul.f32 %v765, %v771
      %v775 = vmul.f32 %v769, %v771
      %v776 = vadd.f32 %v751, %v772
      %v777 = vadd.f32 %v752, %v773
      %v778 = vadd.f32 %v753, %v774
      %v779 = vadd.f32 %v754, %v775
      %780 = vset.pattern.permute.xlu0 3
      %781 = vperm.xlu0 %780, %v701
      %v782 = vpop.permute.xlu0 %781
      %784 = vset.pattern.permute.xlu0 3
      %785 = vperm.xlu0 %784, %v702
      %v786 = vpop.permute.xlu0 %785
      %788 = vset.pattern.permute.xlu0 3
      %789 = vperm.xlu0 %788, %v703
      %v790 = vpop.permute.xlu0 %789
      %792 = vset.pattern.permute.xlu0 3
      %793 = vperm.xlu0 %792, %v704
      %v794 = vpop.permute.xlu0 %793
      %v796 = vperm.slane %v700, 5
      %v797 = vmul.f32 %v782, %v796
      %v798 = vmul.f32 %v786, %v796
      %v799 = vmul.f32 %v790, %v796
      %v800 = vmul.f32 %v794, %v796
      %v801 = vadd.f32 %v776, %v797
      %v802 = vadd.f32 %v777, %v798
      %v803 = vadd.f32 %v778, %v799
      %v804 = vadd.f32 %v779, %v800
      %v805 = vperm.slane %v700, 6
      %v806 = vadd.f32 %v801, %v805
      %v807 = vadd.f32 %v802, %v805
      %v808 = vadd.f32 %v803, %v805
      %v809 = vadd.f32 %v804, %v805
      %v810 = vperm.slane %v700, 1
      %v811 = vmul.f32 %v696, %v810
      %v812 = vmul.f32 %v697, %v810
      %v813 = vmul.f32 %v698, %v810
      %v814 = vmul.f32 %v699, %v810
      %v815 = vperm.slane %v700, 0
      %v816 = vadd.f32 %v815, %v811
      %v817 = vadd.f32 %v815, %v812
      %v818 = vadd.f32 %v815, %v813
      %v819 = vadd.f32 %v815, %v814
      %v820 = vmul.f32 %v696, %v816
      %v821 = vmul.f32 %v697, %v817
      %v822 = vmul.f32 %v698, %v818
      %v823 = vmul.f32 %v699, %v819
      %v824 = vadd.f32 %v820, %v806
      %v825 = vadd.f32 %v821, %v807
      %v826 = vadd.f32 %v822, %v808
      %v827 = vadd.f32 %v823, %v809
      %828 = vst.msk [vmem:[%s410] sm:$0xff] %vm569, %v673
      %829 = vst.msk [vmem:[%s410 + $0x8] sm:$0xff] %vm569, %v676
      %830 = vst.msk [vmem:[%s410 + $0x10] sm:$0xff] %vm569, %v679
      %831 = vst.msk [vmem:[%s410 + $0x18] sm:$0xff] %vm569, %v682
      %836 = vrot.lane.b32.xlu0 %v824, 64
      %v837 = vpop.permute.xlu0 %836
      %838 = vrot.lane.b32.xlu0 %v825, 64
      %v839 = vpop.permute.xlu0 %838
      %840 = vrot.lane.b32.xlu0 %v826, 64
      %v841 = vpop.permute.xlu0 %840
      %842 = vrot.lane.b32.xlu0 %v827, 64
      %v843 = vpop.permute.xlu0 %842
      %vm848 = vcmask 1048064
      %849 = vst.msk [vmem:[%s410] sm:$0xff] %vm848, %v837
      %850 = vst.msk [vmem:[%s410 + $0x8] sm:$0xff] %vm848, %v839
      %851 = vst.msk [vmem:[%s410 + $0x10] sm:$0xff] %vm848, %v841
      %852 = vst.msk [vmem:[%s410 + $0x18] sm:$0xff] %vm848, %v843
      %s853 = smul.u32 4, %s22
      %p854 = scmp.lt.s32.totalorder %s853, 7
      %s855 = scalar_select %p854, %s853, 7
      %s856 = smul.addr %s855, 8
      %s857 = scalar_lea.vmem %s11, %s856
      // Predicated region
      $region65: #{model_forward.3} parent=63 // pred_check
        %p858 = pneg %p281
      $region66: #{model_forward.3} parent=63 // pred_check_branch
        %860 = sbr.rel (%p858) target = $region68
      $region67: #{model_forward.3} parent=63 // pred_region
        %s861 = smul.u32 4, %s22
      $region68: #{model_forward.3} parent=63 // pred_fallthru
        _
    $region64: #{model_forward.3} parent=5 // pred_fallthru
      _
    %p862 = scmp.le.s32.totalorder 2, %s17
    // Predicated region
    $region69: #{model_forward.3} parent=5 // pred_check
      %p863 = pneg %p862
    $region70: #{model_forward.3} parent=5 // pred_check_branch
      %865 = sbr.rel (%p863) target = $region72
    $region71: #{model_forward.3} parent=5 // pred_region
      %s866 = ssub.s32 %s17, 2
      // Predicated region
      $region73: #{model_forward.3} parent=71 // pred_check
        %p867 = pneg %p287
      $region74: #{model_forward.3} parent=71 // pred_check_branch
        %869 = sbr.rel (%p867) target = $region76
      $region75: #{model_forward.3} parent=71 // pred_region
        %s870 = smul.u32 4, %s23
        %p871 = scmp.lt.s32.totalorder %s870, 7
        %s872 = scalar_select %p871, %s870, 7
        %s873 = smul.addr %s872, 8
        %s874 = scalar_lea.vmem %s11, %s873
      $region76: #{model_forward.3} parent=71 // pred_fallthru
        _
    $region72: #{model_forward.3} parent=5 // pred_fallthru
      _
  $region6: #{model_forward.3} parent=0 // loop_footer
    %s21 = sadd.s32 1, %s17
  $region7: #{model_forward.3} parent=0 // loop_footer_branch
    %16 = sbr.rel target = $region3
  $region8: #{model_forward.3} parent=0 // loop_exit
    _

// kernel: model_forward.4
$region0: #{model_forward.4}
  #allocation0 [shape = 'u32[]', space=smem, size = 0x4, offset = 0x4, fixed_abs, tag = 'smem constant byte address 0x4 - core index']
  #allocation1 [shape = 'u32[72,128]{1,0:T(1,128)}', space=vmem, size = 0x9000, scoped, tag = 'internal scratch']
  %s0 = inlined_call_operand.vmem [shape: f32[16,6], index: 0, kind: input, shape index: {}]
  %s1 = inlined_call_operand.vmem [shape: f32[16,4], index: 1, kind: input, shape index: {}]
  %s2 = inlined_call_operand.vmem [shape: f32[6,32], index: 2, kind: input, shape index: {}]
  %s3 = inlined_call_operand.vmem [shape: f32[1,32], index: 3, kind: input, shape index: {}]
  %s4 = inlined_call_operand.vmem [shape: f32[32,64], index: 4, kind: input, shape index: {}]
  %s5 = inlined_call_operand.vmem [shape: f32[1,64], index: 5, kind: input, shape index: {}]
  %s6 = inlined_call_operand.vmem [shape: f32[64,64], index: 6, kind: input, shape index: {}]
  %s7 = inlined_call_operand.vmem [shape: f32[1,64], index: 7, kind: input, shape index: {}]
  %s8 = inlined_call_operand.vmem [shape: f32[64,64], index: 8, kind: input, shape index: {}]
  %s9 = inlined_call_operand.vmem [shape: f32[1,64], index: 9, kind: input, shape index: {}]
  %s10 = inlined_call_operand.vmem [shape: f32[64,64], index: 10, kind: input, shape index: {}]
  %s11 = inlined_call_operand.vmem [shape: f32[1,64], index: 11, kind: input, shape index: {}]
  %s12 = inlined_call_operand.vmem [shape: f32[8,64], index: 12, kind: input, shape index: {}]
  %s13 = inlined_call_operand.vmem [shape: f32[16,128], index: 13, kind: output, shape index: {}]
  %s14 = sld [smem:[#allocation0]]
  $region85: #{model_forward.4} parent=0
    _
  %s16 = ssub.s32 1, %s14
  %s17 = scalar_select 0, %s16, %s14
  loop: start=0, step=1, limit=4
  $region2: #{model_forward.4} parent=0 // loop_pre_header
    _
  $region3: #{model_forward.4} parent=0 // loop_header
    %s19 = sphi 0, %s23
    %p20 = scmp.ge.s32.totalorder %s19, 4
    %s29 = sphi 0, %s31
    %s32 = sphi 0, %s29
    %s33 = sphi 0, %s32
    %s49 = sphi 0, %s33
    %s55 = sphi 0, %s57
    %s58 = sphi 0, %s55
    %s59 = sphi 0, %s58
    %s75 = sphi 0, %s59
    %s79 = sphi 0, %s79
    %s81 = sphi 0, %s79
    %s82 = sphi 0, %s81
    %s96 = sphi 0, %s82
    %s100 = sphi 0, %s100
    %s102 = sphi 0, %s100
    %s103 = sphi 0, %s102
    %s117 = sphi 0, %s103
    %s121 = sphi 0, %s121
    %s123 = sphi 0, %s121
    %s124 = sphi 0, %s123
    %s138 = sphi 0, %s124
    %s142 = sphi 0, %s142
    %s144 = sphi 0, %s142
    %s145 = sphi 0, %s144
    %s159 = sphi 0, %s145
    %s163 = sphi 0, %s163
    %s165 = sphi 0, %s163
    %s166 = sphi 0, %s165
    %s180 = sphi 0, %s166
    %s184 = sphi 0, %s184
    %s186 = sphi 0, %s184
    %s187 = sphi 0, %s186
    %s201 = sphi 0, %s187
    %s205 = sphi 0, %s205
    %s207 = sphi 0, %s205
    %s208 = sphi 0, %s207
    %s222 = sphi 0, %s208
    %s226 = sphi 0, %s226
    %s228 = sphi 0, %s226
    %s229 = sphi 0, %s228
    %s243 = sphi 0, %s229
    %s247 = sphi 0, %s247
    %s249 = sphi 0, %s247
    %s250 = sphi 0, %s249
    %s264 = sphi 0, %s250
    %s268 = sphi 0, %s268
    %s270 = sphi 0, %s268
    %s271 = sphi 0, %s270
    %s285 = sphi 0, %s271
    %s289 = sphi 0, %s289
    %s291 = sphi 0, %s289
    %s292 = sphi 0, %s291
    %s306 = sphi 0, %s292
    %s312 = sphi 0, %s314
    %s315 = sphi 0, %s312
    %s316 = sphi 0, %s315
    %s332 = sphi 0, %s316
  $region4: #{model_forward.4} parent=0 // loop_header_branch
    %22 = sbr.rel (%p20) target = $region8
  $region5: #{model_forward.4} parent=0 // loop_body
    %s24 = ssub.s32 %s19, 1
    %s25 = ssub.s32 %s19, 2
    %s26 = sadd.s32 %s19, 1
    %s27 = ssub.s32 %s19, %s26
    %p28 = scmp.eq.s32.totalorder %s27, 0
    %s30 = sadd.s32 %s29, 1
    %s31 = scalar_select %p28, %s29, %s30
    %p34 = pneg %p28
    %p35 = scmp.eq.s32.totalorder %s19, 1
    %p36 = por %p34, %p35
    %p37 = scmp.ne.s32.totalorder %s29, %s32
    %p38 = scmp.eq.s32.totalorder %s19, 0
    %p39 = por %p37, %p38
    %p40 = scmp.ne.s32.totalorder %s29, %s32
    %p41 = scmp.eq.s32.totalorder %s24, 1
    %p42 = por %p40, %p41
    %p43 = scmp.ne.s32.totalorder %s32, %s33
    %p44 = scmp.eq.s32.totalorder %s24, 0
    %p45 = por %p43, %p44
    %p46 = scmp.ne.s32.totalorder %s32, %s33
    %p47 = scmp.eq.s32.totalorder %s25, 1
    %p48 = por %p46, %p47
    %p50 = scmp.ne.s32.totalorder %s33, %s49
    %p51 = scmp.eq.s32.totalorder %s25, 0
    %p52 = por %p50, %p51
    %s53 = ssub.s32 %s19, %s26
    %p54 = scmp.eq.s32.totalorder %s53, 0
    %s56 = sadd.s32 %s55, 1
    %s57 = scalar_select %p54, %s55, %s56
    %p60 = pneg %p54
    %p61 = scmp.eq.s32.totalorder %s19, 1
    %p62 = por %p60, %p61
    %p63 = scmp.ne.s32.totalorder %s55, %s58
    %p64 = scmp.eq.s32.totalorder %s19, 0
    %p65 = por %p63, %p64
    %p66 = scmp.ne.s32.totalorder %s55, %s58
    %p67 = scmp.eq.s32.totalorder %s24, 1
    %p68 = por %p66, %p67
    %p69 = scmp.ne.s32.totalorder %s58, %s59
    %p70 = scmp.eq.s32.totalorder %s24, 0
    %p71 = por %p69, %p70
    %p72 = scmp.ne.s32.totalorder %s58, %s59
    %p73 = scmp.eq.s32.totalorder %s25, 1
    %p74 = por %p72, %p73
    %p76 = scmp.ne.s32.totalorder %s59, %s75
    %p77 = scmp.eq.s32.totalorder %s25, 0
    %p78 = por %p76, %p77
    %s80 = sadd.s32 %s79, 1
    %p83 = scmp.eq.s32.totalorder %s19, 1
    %p84 = scmp.ne.s32.totalorder %s79, %s81
    %p85 = scmp.eq.s32.totalorder %s19, 0
    %p86 = por %p84, %p85
    %p87 = scmp.ne.s32.totalorder %s79, %s81
    %p88 = scmp.eq.s32.totalorder %s24, 1
    %p89 = por %p87, %p88
    %p90 = scmp.ne.s32.totalorder %s81, %s82
    %p91 = scmp.eq.s32.totalorder %s24, 0
    %p92 = por %p90, %p91
    %p93 = scmp.ne.s32.totalorder %s81, %s82
    %p94 = scmp.eq.s32.totalorder %s25, 1
    %p95 = por %p93, %p94
    %p97 = scmp.ne.s32.totalorder %s82, %s96
    %p98 = scmp.eq.s32.totalorder %s25, 0
    %p99 = por %p97, %p98
    %s101 = sadd.s32 %s100, 1
    %p104 = scmp.eq.s32.totalorder %s19, 1
    %p105 = scmp.ne.s32.totalorder %s100, %s102
    %p106 = scmp.eq.s32.totalorder %s19, 0
    %p107 = por %p105, %p106
    %p108 = scmp.ne.s32.totalorder %s100, %s102
    %p109 = scmp.eq.s32.totalorder %s24, 1
    %p110 = por %p108, %p109
    %p111 = scmp.ne.s32.totalorder %s102, %s103
    %p112 = scmp.eq.s32.totalorder %s24, 0
    %p113 = por %p111, %p112
    %p114 = scmp.ne.s32.totalorder %s102, %s103
    %p115 = scmp.eq.s32.totalorder %s25, 1
    %p116 = por %p114, %p115
    %p118 = scmp.ne.s32.totalorder %s103, %s117
    %p119 = scmp.eq.s32.totalorder %s25, 0
    %p120 = por %p118, %p119
    %s122 = sadd.s32 %s121, 1
    %p125 = scmp.eq.s32.totalorder %s19, 1
    %p126 = scmp.ne.s32.totalorder %s121, %s123
    %p127 = scmp.eq.s32.totalorder %s19, 0
    %p128 = por %p126, %p127
    %p129 = scmp.ne.s32.totalorder %s121, %s123
    %p130 = scmp.eq.s32.totalorder %s24, 1
    %p131 = por %p129, %p130
    %p132 = scmp.ne.s32.totalorder %s123, %s124
    %p133 = scmp.eq.s32.totalorder %s24, 0
    %p134 = por %p132, %p133
    %p135 = scmp.ne.s32.totalorder %s123, %s124
    %p136 = scmp.eq.s32.totalorder %s25, 1
    %p137 = por %p135, %p136
    %p139 = scmp.ne.s32.totalorder %s124, %s138
    %p140 = scmp.eq.s32.totalorder %s25, 0
    %p141 = por %p139, %p140
    %s143 = sadd.s32 %s142, 1
    %p146 = scmp.eq.s32.totalorder %s19, 1
    %p147 = scmp.ne.s32.totalorder %s142, %s144
    %p148 = scmp.eq.s32.totalorder %s19, 0
    %p149 = por %p147, %p148
    %p150 = scmp.ne.s32.totalorder %s142, %s144
    %p151 = scmp.eq.s32.totalorder %s24, 1
    %p152 = por %p150, %p151
    %p153 = scmp.ne.s32.totalorder %s144, %s145
    %p154 = scmp.eq.s32.totalorder %s24, 0
    %p155 = por %p153, %p154
    %p156 = scmp.ne.s32.totalorder %s144, %s145
    %p157 = scmp.eq.s32.totalorder %s25, 1
    %p158 = por %p156, %p157
    %p160 = scmp.ne.s32.totalorder %s145, %s159
    %p161 = scmp.eq.s32.totalorder %s25, 0
    %p162 = por %p160, %p161
    %s164 = sadd.s32 %s163, 1
    %p167 = scmp.eq.s32.totalorder %s19, 1
    %p168 = scmp.ne.s32.totalorder %s163, %s165
    %p169 = scmp.eq.s32.totalorder %s19, 0
    %p170 = por %p168, %p169
    %p171 = scmp.ne.s32.totalorder %s163, %s165
    %p172 = scmp.eq.s32.totalorder %s24, 1
    %p173 = por %p171, %p172
    %p174 = scmp.ne.s32.totalorder %s165, %s166
    %p175 = scmp.eq.s32.totalorder %s24, 0
    %p176 = por %p174, %p175
    %p177 = scmp.ne.s32.totalorder %s165, %s166
    %p178 = scmp.eq.s32.totalorder %s25, 1
    %p179 = por %p177, %p178
    %p181 = scmp.ne.s32.totalorder %s166, %s180
    %p182 = scmp.eq.s32.totalorder %s25, 0
    %p183 = por %p181, %p182
    %s185 = sadd.s32 %s184, 1
    %p188 = scmp.eq.s32.totalorder %s19, 1
    %p189 = scmp.ne.s32.totalorder %s184, %s186
    %p190 = scmp.eq.s32.totalorder %s19, 0
    %p191 = por %p189, %p190
    %p192 = scmp.ne.s32.totalorder %s184, %s186
    %p193 = scmp.eq.s32.totalorder %s24, 1
    %p194 = por %p192, %p193
    %p195 = scmp.ne.s32.totalorder %s186, %s187
    %p196 = scmp.eq.s32.totalorder %s24, 0
    %p197 = por %p195, %p196
    %p198 = scmp.ne.s32.totalorder %s186, %s187
    %p199 = scmp.eq.s32.totalorder %s25, 1
    %p200 = por %p198, %p199
    %p202 = scmp.ne.s32.totalorder %s187, %s201
    %p203 = scmp.eq.s32.totalorder %s25, 0
    %p204 = por %p202, %p203
    %s206 = sadd.s32 %s205, 1
    %p209 = scmp.eq.s32.totalorder %s19, 1
    %p210 = scmp.ne.s32.totalorder %s205, %s207
    %p211 = scmp.eq.s32.totalorder %s19, 0
    %p212 = por %p210, %p211
    %p213 = scmp.ne.s32.totalorder %s205, %s207
    %p214 = scmp.eq.s32.totalorder %s24, 1
    %p215 = por %p213, %p214
    %p216 = scmp.ne.s32.totalorder %s207, %s208
    %p217 = scmp.eq.s32.totalorder %s24, 0
    %p218 = por %p216, %p217
    %p219 = scmp.ne.s32.totalorder %s207, %s208
    %p220 = scmp.eq.s32.totalorder %s25, 1
    %p221 = por %p219, %p220
    %p223 = scmp.ne.s32.totalorder %s208, %s222
    %p224 = scmp.eq.s32.totalorder %s25, 0
    %p225 = por %p223, %p224
    %s227 = sadd.s32 %s226, 1
    %p230 = scmp.eq.s32.totalorder %s19, 1
    %p231 = scmp.ne.s32.totalorder %s226, %s228
    %p232 = scmp.eq.s32.totalorder %s19, 0
    %p233 = por %p231, %p232
    %p234 = scmp.ne.s32.totalorder %s226, %s228
    %p235 = scmp.eq.s32.totalorder %s24, 1
    %p236 = por %p234, %p235
    %p237 = scmp.ne.s32.totalorder %s228, %s229
    %p238 = scmp.eq.s32.totalorder %s24, 0
    %p239 = por %p237, %p238
    %p240 = scmp.ne.s32.totalorder %s228, %s229
    %p241 = scmp.eq.s32.totalorder %s25, 1
    %p242 = por %p240, %p241
    %p244 = scmp.ne.s32.totalorder %s229, %s243
    %p245 = scmp.eq.s32.totalorder %s25, 0
    %p246 = por %p244, %p245
    %s248 = sadd.s32 %s247, 1
    %p251 = scmp.eq.s32.totalorder %s19, 1
    %p252 = scmp.ne.s32.totalorder %s247, %s249
    %p253 = scmp.eq.s32.totalorder %s19, 0
    %p254 = por %p252, %p253
    %p255 = scmp.ne.s32.totalorder %s247, %s249
    %p256 = scmp.eq.s32.totalorder %s24, 1
    %p257 = por %p255, %p256
    %p258 = scmp.ne.s32.totalorder %s249, %s250
    %p259 = scmp.eq.s32.totalorder %s24, 0
    %p260 = por %p258, %p259
    %p261 = scmp.ne.s32.totalorder %s249, %s250
    %p262 = scmp.eq.s32.totalorder %s25, 1
    %p263 = por %p261, %p262
    %p265 = scmp.ne.s32.totalorder %s250, %s264
    %p266 = scmp.eq.s32.totalorder %s25, 0
    %p267 = por %p265, %p266
    %s269 = sadd.s32 %s268, 1
    %p272 = scmp.eq.s32.totalorder %s19, 1
    %p273 = scmp.ne.s32.totalorder %s268, %s270
    %p274 = scmp.eq.s32.totalorder %s19, 0
    %p275 = por %p273, %p274
    %p276 = scmp.ne.s32.totalorder %s268, %s270
    %p277 = scmp.eq.s32.totalorder %s24, 1
    %p278 = por %p276, %p277
    %p279 = scmp.ne.s32.totalorder %s270, %s271
    %p280 = scmp.eq.s32.totalorder %s24, 0
    %p281 = por %p279, %p280
    %p282 = scmp.ne.s32.totalorder %s270, %s271
    %p283 = scmp.eq.s32.totalorder %s25, 1
    %p284 = por %p282, %p283
    %p286 = scmp.ne.s32.totalorder %s271, %s285
    %p287 = scmp.eq.s32.totalorder %s25, 0
    %p288 = por %p286, %p287
    %s290 = sadd.s32 %s289, 1
    %p293 = scmp.eq.s32.totalorder %s19, 1
    %p294 = scmp.ne.s32.totalorder %s289, %s291
    %p295 = scmp.eq.s32.totalorder %s19, 0
    %p296 = por %p294, %p295
    %p297 = scmp.ne.s32.totalorder %s289, %s291
    %p298 = scmp.eq.s32.totalorder %s24, 1
    %p299 = por %p297, %p298
    %p300 = scmp.ne.s32.totalorder %s291, %s292
    %p301 = scmp.eq.s32.totalorder %s24, 0
    %p302 = por %p300, %p301
    %p303 = scmp.ne.s32.totalorder %s291, %s292
    %p304 = scmp.eq.s32.totalorder %s25, 1
    %p305 = por %p303, %p304
    %p307 = scmp.ne.s32.totalorder %s292, %s306
    %p308 = scmp.eq.s32.totalorder %s25, 0
    %p309 = por %p307, %p308
    %s310 = ssub.s32 %s19, %s26
    %p311 = scmp.eq.s32.totalorder %s310, 0
    %s313 = sadd.s32 %s312, 1
    %s314 = scalar_select %p311, %s312, %s313
    %p317 = pneg %p311
    %p318 = scmp.eq.s32.totalorder %s19, 1
    %p319 = por %p317, %p318
    %p320 = scmp.ne.s32.totalorder %s312, %s315
    %p321 = scmp.eq.s32.totalorder %s19, 0
    %p322 = por %p320, %p321
    %p323 = scmp.ne.s32.totalorder %s312, %s315
    %p324 = scmp.eq.s32.totalorder %s24, 1
    %p325 = por %p323, %p324
    %p326 = scmp.ne.s32.totalorder %s315, %s316
    %p327 = scmp.eq.s32.totalorder %s24, 0
    %p328 = por %p326, %p327
    %p329 = scmp.ne.s32.totalorder %s315, %s316
    %p330 = scmp.eq.s32.totalorder %s25, 1
    %p331 = por %p329, %p330
    %p333 = scmp.ne.s32.totalorder %s316, %s332
    %p334 = scmp.eq.s32.totalorder %s25, 0
    %p335 = por %p333, %p334
    %p336 = scmp.le.s32.totalorder 1, %s19
    %p337 = scmp.lt.s32.totalorder %s19, 3
    %p338 = pnand %p336, %p337
    %p339 = pneg %p338
    // Predicated region
    $region9: #{model_forward.4} parent=5 // pred_check
      _
    $region10: #{model_forward.4} parent=5 // pred_check_branch
      %341 = sbr.rel (%p338) target = $region12
    $region11: #{model_forward.4} parent=5 // pred_region
      %s342 = ssub.s32 %s19, 1
      // Predicated region
      $region13: #{model_forward.4} parent=11 // pred_check
        %p343 = pneg %p92
      $region14: #{model_forward.4} parent=11 // pred_check_branch
        %345 = sbr.rel (%p343) target = $region16
      $region15: #{model_forward.4} parent=11 // pred_region
        _
      $region16: #{model_forward.4} parent=11 // pred_fallthru
        _
      // Predicated region
      $region17: #{model_forward.4} parent=11 // pred_check
        %p346 = pneg %p113
      $region18: #{model_forward.4} parent=11 // pred_check_branch
        %348 = sbr.rel (%p346) target = $region20
      $region19: #{model_forward.4} parent=11 // pred_region
        _
      $region20: #{model_forward.4} parent=11 // pred_fallthru
        _
      // Predicated region
      $region21: #{model_forward.4} parent=11 // pred_check
        %p349 = pneg %p134
      $region22: #{model_forward.4} parent=11 // pred_check_branch
        %351 = sbr.rel (%p349) target = $region24
      $region23: #{model_forward.4} parent=11 // pred_region
        _
      $region24: #{model_forward.4} parent=11 // pred_fallthru
        _
      // Predicated region
      $region25: #{model_forward.4} parent=11 // pred_check
        %p352 = pneg %p155
      $region26: #{model_forward.4} parent=11 // pred_check_branch
        %354 = sbr.rel (%p352) target = $region28
      $region27: #{model_forward.4} parent=11 // pred_region
        _
      $region28: #{model_forward.4} parent=11 // pred_fallthru
        _
      // Predicated region
      $region29: #{model_forward.4} parent=11 // pred_check
        %p355 = pneg %p176
      $region30: #{model_forward.4} parent=11 // pred_check_branch
        %357 = sbr.rel (%p355) target = $region32
      $region31: #{model_forward.4} parent=11 // pred_region
        _
      $region32: #{model_forward.4} parent=11 // pred_fallthru
        _
      // Predicated region
      $region33: #{model_forward.4} parent=11 // pred_check
        %p358 = pneg %p197
      $region34: #{model_forward.4} parent=11 // pred_check_branch
        %360 = sbr.rel (%p358) target = $region36
      $region35: #{model_forward.4} parent=11 // pred_region
        _
      $region36: #{model_forward.4} parent=11 // pred_fallthru
        _
      // Predicated region
      $region37: #{model_forward.4} parent=11 // pred_check
        %p361 = pneg %p218
      $region38: #{model_forward.4} parent=11 // pred_check_branch
        %363 = sbr.rel (%p361) target = $region40
      $region39: #{model_forward.4} parent=11 // pred_region
        _
      $region40: #{model_forward.4} parent=11 // pred_fallthru
        _
      // Predicated region
      $region41: #{model_forward.4} parent=11 // pred_check
        %p364 = pneg %p239
      $region42: #{model_forward.4} parent=11 // pred_check_branch
        %366 = sbr.rel (%p364) target = $region44
      $region43: #{model_forward.4} parent=11 // pred_region
        _
      $region44: #{model_forward.4} parent=11 // pred_fallthru
        _
      // Predicated region
      $region45: #{model_forward.4} parent=11 // pred_check
        %p367 = pneg %p260
      $region46: #{model_forward.4} parent=11 // pred_check_branch
        %369 = sbr.rel (%p367) target = $region48
      $region47: #{model_forward.4} parent=11 // pred_region
        _
      $region48: #{model_forward.4} parent=11 // pred_fallthru
        _
      // Predicated region
      $region49: #{model_forward.4} parent=11 // pred_check
        %p370 = pneg %p281
      $region50: #{model_forward.4} parent=11 // pred_check_branch
        %372 = sbr.rel (%p370) target = $region52
      $region51: #{model_forward.4} parent=11 // pred_region
        _
      $region52: #{model_forward.4} parent=11 // pred_fallthru
        _
      // Predicated region
      $region53: #{model_forward.4} parent=11 // pred_check
        %p373 = pneg %p302
      $region54: #{model_forward.4} parent=11 // pred_check_branch
        %375 = sbr.rel (%p373) target = $region56
      $region55: #{model_forward.4} parent=11 // pred_region
        _
      $region56: #{model_forward.4} parent=11 // pred_fallthru
        _
    $region12: #{model_forward.4} parent=5 // pred_fallthru
      _
    %p376 = scmp.lt.s32.totalorder %s19, 2
    // Predicated region
    $region57: #{model_forward.4} parent=5 // pred_check
      %p377 = pneg %p376
    $region58: #{model_forward.4} parent=5 // pred_check_branch
      %379 = sbr.rel (%p377) target = $region60
    $region59: #{model_forward.4} parent=5 // pred_region
      // Predicated region
      $region61: #{model_forward.4} parent=59 // pred_check
        %p380 = pneg %p39
      $region62: #{model_forward.4} parent=59 // pred_check_branch
        %382 = sbr.rel (%p380) target = $region64
      $region63: #{model_forward.4} parent=59 // pred_region
        %p383 = scmp.lt.s32.totalorder %s19, 1
        %s384 = scalar_select %p383, %s19, 1
        %s385 = smul.addr %s384, 8
        %s386 = scalar_lea.vmem %s0, %s385
      $region64: #{model_forward.4} parent=59 // pred_fallthru
        _
      // Predicated region
      $region65: #{model_forward.4} parent=59 // pred_check
        %p387 = pneg %p65
      $region66: #{model_forward.4} parent=59 // pred_check_branch
        %389 = sbr.rel (%p387) target = $region68
      $region67: #{model_forward.4} parent=59 // pred_region
        %p390 = scmp.lt.s32.totalorder %s19, 1
        %s391 = scalar_select %p390, %s19, 1
        %s392 = smul.addr %s391, 8
        %s393 = scalar_lea.vmem %s1, %s392
      $region68: #{model_forward.4} parent=59 // pred_fallthru
        _
    $region60: #{model_forward.4} parent=5 // pred_fallthru
      _
    %p394 = scmp.le.s32.totalorder 1, %s19
    %p395 = scmp.lt.s32.totalorder %s19, 3
    %p396 = pnand %p394, %p395
    %p397 = pneg %p396
    // Predicated region
    $region69: #{model_forward.4} parent=5 // pred_check
      _
    $region70: #{model_forward.4} parent=5 // pred_check_branch
      %399 = sbr.rel (%p396) target = $region72
    $region71: #{model_forward.4} parent=5 // pred_region
      %s400 = ssub.s32 %s19, 1
      %p401 = scmp.lt.s32.totalorder %s24, 1
      %s402 = scalar_select %p401, %s24, 1
      %s403 = smul.addr %s402, 8
      %s404 = scalar_lea.vmem %s0, %s403
      %p405 = pneg %p45
      %p406 = pneg %p42
      %p407 = scmp.lt.s32.totalorder %s24, 1
      %s408 = scalar_select %p407, %s24, 1
      %s409 = smul.addr %s408, 8
      %s410 = scalar_lea.vmem %s1, %s409
      %p411 = pneg %p71
      %p412 = pneg %p68
      %p413 = pneg %p92
      %p414 = pneg %p89
      %p415 = pneg %p113
      %p416 = pneg %p110
      %p417 = pneg %p134
      %p418 = pneg %p131
      %p419 = pneg %p155
      %p420 = pneg %p152
      %p421 = pneg %p176
      %p422 = pneg %p173
      %p423 = pneg %p197
      %p424 = pneg %p194
      %p425 = pneg %p218
      %p426 = pneg %p215
      %p427 = pneg %p239
      %p428 = pneg %p236
      %p429 = pneg %p260
      %p430 = pneg %p257
      %p431 = pneg %p281
      %p432 = pneg %p278
      %p433 = pneg %p302
      %p434 = pneg %p299
      %p435 = pneg %p328
      %p436 = pneg %p325
      %p437 = scmp.lt.s32.totalorder %s24, 1
      %s438 = scalar_select %p437, %s24, 1
      %s439 = smul.addr %s438, 8
      %s440 = scalar_lea.vmem %s13, %s439
      %p441 = scmp.lt.s32.totalorder %s24, 1
      %s442 = scalar_select %p441, %s24, 1
      %s443 = smul.addr %s442, 8
      %s444 = scalar_lea.vmem %s0, %s443
      %p445 = scmp.lt.s32.totalorder %s24, 1
      %s446 = scalar_select %p445, %s24, 1
      %s447 = smul.addr %s446, 8
      %s448 = scalar_lea.vmem %s1, %s447
      %p449 = scmp.lt.s32.totalorder %s24, 1
      %s450 = scalar_select %p449, %s24, 1
      %s451 = smul.addr %s450, 8
      %s452 = scalar_lea.vmem %s13, %s451
      %v453 = vld [vmem:[%s444] sm:$0xff]
      %v454 = vld [vmem:[%s2] sm:$0x3f]
      %v455 = vld [vmem:[%s3] sm:$0x1]
      %v457 = vperm.slane %v455, 0
      %vm459 = vcmask 48128
      %v461 = vsel %vm459, %v453, 0
      %vm463 = vcmask 1045504
      %v465 = vsel %vm463, %v454, 0
      %467 = vmatpush.msra.mxu0 0.0
      %468 = vmatpush.msra.mxu0 0.0
      %469 = vmatpush.msra.mxu0 0.0
      %470 = vmatpush.msra.mxu0 0.0
      %471 = vmatpush.msra.mxu0 0.0
      %472 = vmatpush.msra.mxu0 0.0
      %473 = vmatpush.msra.mxu0 0.0
      %474 = vmatpush.msra.mxu0 0.0
      %475 = vmatpush.msra.mxu0 0.0
      %476 = vmatpush.msra.mxu0 0.0
      %477 = vmatpush.msra.mxu0 0.0
      %478 = vmatpush.msra.mxu0 0.0
      %479 = vmatpush.msra.mxu0 0.0
      %480 = vmatpush.msra.mxu0 0.0
      %481 = vmatpush.msra.mxu0 0.0
      %482 = vmatpush.msra.mxu0 %v465
      %483 = vmatmul.f32.gmra.mxu0 %v461
      %v484 = vpop.f32.mrf.mxu0
      %v485 = vadd.f32 %v457, %v484
      %486 = vdwg.mxu0
      %v487 = vmul.f32 %v485, 0.5
      %v488 = vtanh.pop %v487
      %v489 = vmul.f32 %v488, 0.5
      %v490 = vadd.f32 %v489, 0.5
      %v491 = vmul.f32 %v485, %v490
      %v492 = vld [vmem:[%s4] sm:$0xff]
      %v493 = vld [vmem:[%s4 + $0x8] sm:$0xff]
      %v494 = vld [vmem:[%s4 + $0x10] sm:$0xff]
      %v495 = vld [vmem:[%s4 + $0x18] sm:$0xff]
      %v496 = vld [vmem:[%s5] sm:$0x1]
      %v498 = vperm.slane %v496, 0
      %vm500 = vcmask 261120
      %v502 = vsel %vm500, %v491, 0
      %504 = vmatpush.msra.mxu0 0.0
      %505 = vmatpush.msra.mxu0 0.0
      %506 = vmatpush.msra.mxu0 0.0
      %507 = vmatpush.msra.mxu0 0.0
      %508 = vmatpush.msra.mxu0 0.0
      %509 = vmatpush.msra.mxu0 0.0
      %510 = vmatpush.msra.mxu0 0.0
      %511 = vmatpush.msra.mxu0 0.0
      %512 = vmatpush.msra.mxu0 0.0
      %513 = vmatpush.msra.mxu0 0.0
      %514 = vmatpush.msra.mxu0 0.0
      %515 = vmatpush.msra.mxu0 0.0
      %516 = vmatpush.msra.mxu0 %v495
      %517 = vmatpush.msra.mxu0 %v494
      %518 = vmatpush.msra.mxu0 %v493
      %519 = vmatpush.msra.mxu0 %v492
      %520 = vmatmul.f32.gmra.mxu0 %v502
      %v521 = vpop.f32.mrf.mxu0
      %v522 = vadd.f32 %v498, %v521
      %523 = vdwg.mxu0
      %v524 = vmul.f32 %v522, 0.5
      %v525 = vtanh.pop %v524
      %v526 = vmul.f32 %v525, 0.5
      %v527 = vadd.f32 %v526, 0.5
      %v528 = vmul.f32 %v522, %v527
      %v529 = vld [vmem:[%s6] sm:$0xff]
      %v530 = vld [vmem:[%s6 + $0x8] sm:$0xff]
      %v531 = vld [vmem:[%s6 + $0x10] sm:$0xff]
      %v532 = vld [vmem:[%s6 + $0x18] sm:$0xff]
      %v533 = vld [vmem:[%s6 + $0x20] sm:$0xff]
      %v534 = vld [vmem:[%s6 + $0x28] sm:$0xff]
      %v535 = vld [vmem:[%s6 + $0x30] sm:$0xff]
      %v536 = vld [vmem:[%s6 + $0x38] sm:$0xff]
      %v537 = vld [vmem:[%s7] sm:$0x1]
      %v539 = vperm.slane %v537, 0
      %vm541 = vcmask 523264
      %v543 = vsel %vm541, %v528, 0
      %545 = vmatpush.msra.mxu0 0.0
      %546 = vmatpush.msra.mxu0 0.0
      %547 = vmatpush.msra.mxu0 0.0
      %548 = vmatpush.msra.mxu0 0.0
      %549 = vmatpush.msra.mxu0 0.0
      %550 = vmatpush.msra.mxu0 0.0
      %551 = vmatpush.msra.mxu0 0.0
      %552 = vmatpush.msra.mxu0 0.0
      %553 = vmatpush.msra.mxu0 %v536
      %554 = vmatpush.msra.mxu0 %v535
      %555 = vmatpush.msra.mxu0 %v534
      %556 = vmatpush.msra.mxu0 %v533
      %557 = vmatpush.msra.mxu0 %v532
      %558 = vmatpush.msra.mxu0 %v531
      %559 = vmatpush.msra.mxu0 %v530
      %560 = vmatpush.msra.mxu0 %v529
      %561 = vmatmul.f32.gmra.mxu0 %v543
      %v562 = vpop.f32.mrf.mxu0
      %v563 = vadd.f32 %v539, %v562
      %564 = vdwg.mxu0
      %v565 = vmul.f32 %v563, 0.5
      %v566 = vtanh.pop %v565
      %v567 = vmul.f32 %v566, 0.5
      %v568 = vadd.f32 %v567, 0.5
      %v569 = vmul.f32 %v563, %v568
      %v570 = vld [vmem:[%s8] sm:$0xff]
      %v571 = vld [vmem:[%s8 + $0x8] sm:$0xff]
      %v572 = vld [vmem:[%s8 + $0x10] sm:$0xff]
      %v573 = vld [vmem:[%s8 + $0x18] sm:$0xff]
      %v574 = vld [vmem:[%s8 + $0x20] sm:$0xff]
      %v575 = vld [vmem:[%s8 + $0x28] sm:$0xff]
      %v576 = vld [vmem:[%s8 + $0x30] sm:$0xff]
      %v577 = vld [vmem:[%s8 + $0x38] sm:$0xff]
      %v578 = vld [vmem:[%s9] sm:$0x1]
      %v580 = vperm.slane %v578, 0
      %v583 = vsel %vm541, %v569, 0
      %585 = vmatpush.msra.mxu0 0.0
      %586 = vmatpush.msra.mxu0 0.0
      %587 = vmatpush.msra.mxu0 0.0
      %588 = vmatpush.msra.mxu0 0.0
      %589 = vmatpush.msra.mxu0 0.0
      %590 = vmatpush.msra.mxu0 0.0
      %591 = vmatpush.msra.mxu0 0.0
      %592 = vmatpush.msra.mxu0 0.0
      %593 = vmatpush.msra.mxu0 %v577
      %594 = vmatpush.msra.mxu0 %v576
      %595 = vmatpush.msra.mxu0 %v575
      %596 = vmatpush.msra.mxu0 %v574
      %597 = vmatpush.msra.mxu0 %v573
      %598 = vmatpush.msra.mxu0 %v572
      %599 = vmatpush.msra.mxu0 %v571
      %600 = vmatpush.msra.mxu0 %v570
      %601 = vmatmul.f32.gmra.mxu0 %v583
      %v602 = vpop.f32.mrf.mxu0
      %v603 = vadd.f32 %v580, %v602
      %604 = vdwg.mxu0
      %v605 = vmul.f32 %v603, 0.5
      %v606 = vtanh.pop %v605
      %v607 = vmul.f32 %v606, 0.5
      %v608 = vadd.f32 %v607, 0.5
      %v609 = vmul.f32 %v603, %v608
      %v610 = vld [vmem:[%s10] sm:$0xff]
      %v611 = vld [vmem:[%s10 + $0x8] sm:$0xff]
      %v612 = vld [vmem:[%s10 + $0x10] sm:$0xff]
      %v613 = vld [vmem:[%s10 + $0x18] sm:$0xff]
      %v614 = vld [vmem:[%s10 + $0x20] sm:$0xff]
      %v615 = vld [vmem:[%s10 + $0x28] sm:$0xff]
      %v616 = vld [vmem:[%s10 + $0x30] sm:$0xff]
      %v617 = vld [vmem:[%s10 + $0x38] sm:$0xff]
      %v618 = vld [vmem:[%s11] sm:$0x1]
      %v620 = vperm.slane %v618, 0
      %v623 = vsel %vm541, %v609, 0
      %625 = vmatpush.msra.mxu0 0.0
      %626 = vmatpush.msra.mxu0 0.0
      %627 = vmatpush.msra.mxu0 0.0
      %628 = vmatpush.msra.mxu0 0.0
      %629 = vmatpush.msra.mxu0 0.0
      %630 = vmatpush.msra.mxu0 0.0
      %631 = vmatpush.msra.mxu0 0.0
      %632 = vmatpush.msra.mxu0 0.0
      %633 = vmatpush.msra.mxu0 %v617
      %634 = vmatpush.msra.mxu0 %v616
      %635 = vmatpush.msra.mxu0 %v615
      %636 = vmatpush.msra.mxu0 %v614
      %637 = vmatpush.msra.mxu0 %v613
      %638 = vmatpush.msra.mxu0 %v612
      %639 = vmatpush.msra.mxu0 %v611
      %640 = vmatpush.msra.mxu0 %v610
      %641 = vmatmul.f32.gmra.mxu0 %v623
      %v642 = vpop.f32.mrf.mxu0
      %v643 = vadd.f32 %v620, %v642
      %644 = vdwg.mxu0
      %v645 = vmul.f32 %v643, 0.5
      %v646 = vtanh.pop %v645
      %v647 = vmul.f32 %v646, 0.5
      %v648 = vadd.f32 %v647, 0.5
      %v649 = vld [vmem:[%s12] sm:$0xff]
      %v650 = vld [vmem:[%s448] sm:$0xff]
      %652 = vset.pattern.permute.xlu0 0
      %653 = vperm.xlu0 %652, %v650
      %v654 = vpop.permute.xlu0 %653
      %v656 = vperm.slane %v649, 2
      %v657 = vmul.f32 %v654, %v656
      %658 = vset.pattern.permute.xlu0 1
      %659 = vperm.xlu0 %658, %v650
      %v660 = vpop.permute.xlu0 %659
      %v662 = vperm.slane %v649, 3
      %v663 = vmul.f32 %v660, %v662
      %v664 = vadd.f32 %v657, %v663
      %665 = vset.pattern.permute.xlu0 2
      %666 = vperm.xlu0 %665, %v650
      %v667 = vpop.permute.xlu0 %666
      %v669 = vperm.slane %v649, 4
      %v670 = vmul.f32 %v667, %v669
      %v671 = vadd.f32 %v664, %v670
      %672 = vset.pattern.permute.xlu0 3
      %673 = vperm.xlu0 %672, %v650
      %v674 = vpop.permute.xlu0 %673
      %v676 = vperm.slane %v649, 5
      %v677 = vmul.f32 %v674, %v676
      %v678 = vadd.f32 %v671, %v677
      %v679 = vperm.slane %v649, 6
      %v680 = vadd.f32 %v678, %v679
      %v681 = vperm.slane %v649, 1
      %v682 = vmul.f32 %v648, %v681
      %v683 = vperm.slane %v649, 0
      %v684 = vadd.f32 %v683, %v682
      %v685 = vmul.f32 %v648, %v684
      %v686 = vadd.f32 %v685, %v680
      %687 = vst.msk [vmem:[%s452] sm:$0xff] %vm541, %v643
      %689 = vrot.lane.b32.xlu0 %v686, 64
      %v690 = vpop.permute.xlu0 %689
      %vm692 = vcmask 1048064
      %693 = vst.msk [vmem:[%s452] sm:$0xff] %vm692, %v690
      %p694 = scmp.lt.s32.totalorder %s24, 1
      %s695 = scalar_select %p694, %s24, 1
      %s696 = smul.addr %s695, 8
      %s697 = scalar_lea.vmem %s13, %s696
      // Predicated region
      $region73: #{model_forward.4} parent=71 // pred_check
        %p698 = pneg %p325
      $region74: #{model_forward.4} parent=71 // pred_check_branch
        %700 = sbr.rel (%p698) target = $region76
      $region75: #{model_forward.4} parent=71 // pred_region
        _
      $region76: #{model_forward.4} parent=71 // pred_fallthru
        _
    $region72: #{model_forward.4} parent=5 // pred_fallthru
      _
    %p701 = scmp.le.s32.totalorder 2, %s19
    // Predicated region
    $region77: #{model_forward.4} parent=5 // pred_check
      %p702 = pneg %p701
    $region78: #{model_forward.4} parent=5 // pred_check_branch
      %704 = sbr.rel (%p702) target = $region80
    $region79: #{model_forward.4} parent=5 // pred_region
      %s705 = ssub.s32 %s19, 2
      // Predicated region
      $region81: #{model_forward.4} parent=79 // pred_check
        %p706 = pneg %p331
      $region82: #{model_forward.4} parent=79 // pred_check_branch
        %708 = sbr.rel (%p706) target = $region84
      $region83: #{model_forward.4} parent=79 // pred_region
        %p709 = scmp.lt.s32.totalorder %s25, 1
        %s710 = scalar_select %p709, %s25, 1
        %s711 = smul.addr %s710, 8
        %s712 = scalar_lea.vmem %s13, %s711
      $region84: #{model_forward.4} parent=79 // pred_fallthru
        _
    $region80: #{model_forward.4} parent=5 // pred_fallthru
      _
  $region6: #{model_forward.4} parent=0 // loop_footer
    %s23 = sadd.s32 1, %s19
  $region7: #{model_forward.4} parent=0 // loop_footer_branch
    %18 = sbr.rel target = $region3
  $region8: #{model_forward.4} parent=0 // loop_exit
    _

// kernel: model_forward.5
$region0: #{model_forward.5}
  #allocation0 [shape = 'u32[]', space=smem, size = 0x4, offset = 0x4, fixed_abs, tag = 'smem constant byte address 0x4 - core index']
  #allocation1 [shape = 'u32[72,128]{1,0:T(1,128)}', space=vmem, size = 0x9000, scoped, tag = 'internal scratch']
  %s0 = inlined_call_operand.vmem [shape: f32[4,6], index: 0, kind: input, shape index: {}]
  %s1 = inlined_call_operand.vmem [shape: f32[4,4], index: 1, kind: input, shape index: {}]
  %s2 = inlined_call_operand.vmem [shape: f32[6,32], index: 2, kind: input, shape index: {}]
  %s3 = inlined_call_operand.vmem [shape: f32[1,32], index: 3, kind: input, shape index: {}]
  %s4 = inlined_call_operand.vmem [shape: f32[32,64], index: 4, kind: input, shape index: {}]
  %s5 = inlined_call_operand.vmem [shape: f32[1,64], index: 5, kind: input, shape index: {}]
  %s6 = inlined_call_operand.vmem [shape: f32[64,64], index: 6, kind: input, shape index: {}]
  %s7 = inlined_call_operand.vmem [shape: f32[1,64], index: 7, kind: input, shape index: {}]
  %s8 = inlined_call_operand.vmem [shape: f32[64,64], index: 8, kind: input, shape index: {}]
  %s9 = inlined_call_operand.vmem [shape: f32[1,64], index: 9, kind: input, shape index: {}]
  %s10 = inlined_call_operand.vmem [shape: f32[64,64], index: 10, kind: input, shape index: {}]
  %s11 = inlined_call_operand.vmem [shape: f32[1,64], index: 11, kind: input, shape index: {}]
  %s12 = inlined_call_operand.vmem [shape: f32[64,64], index: 12, kind: input, shape index: {}]
  %s13 = inlined_call_operand.vmem [shape: f32[1,64], index: 13, kind: input, shape index: {}]
  %s14 = inlined_call_operand.vmem [shape: f32[8,64], index: 14, kind: input, shape index: {}]
  %s15 = inlined_call_operand.vmem [shape: f32[4,128], index: 15, kind: output, shape index: {}]
  %s16 = sld [smem:[#allocation0]]
  $region70: #{model_forward.5} parent=0
    _
  %s18 = ssub.s32 1, %s16
  %s19 = scalar_select 0, %s18, %s16
  // Predicated region
  $region2: #{model_forward.5} parent=0 // pred_check
    _
  $region3: #{model_forward.5} parent=0 // pred_check_branch
    %21 = sbr.rel (0) target = $region5
  $region4: #{model_forward.5} parent=0 // pred_region
    _
  $region5: #{model_forward.5} parent=0 // pred_fallthru
    _
  // Predicated region
  $region6: #{model_forward.5} parent=0 // pred_check
    _
  $region7: #{model_forward.5} parent=0 // pred_check_branch
    %23 = sbr.rel (0) target = $region9
  $region8: #{model_forward.5} parent=0 // pred_region
    _
  $region9: #{model_forward.5} parent=0 // pred_fallthru
    _
  // Predicated region
  $region10: #{model_forward.5} parent=0 // pred_check
    _
  $region11: #{model_forward.5} parent=0 // pred_check_branch
    %25 = sbr.rel (0) target = $region13
  $region12: #{model_forward.5} parent=0 // pred_region
    _
  $region13: #{model_forward.5} parent=0 // pred_fallthru
    _
  // Predicated region
  $region14: #{model_forward.5} parent=0 // pred_check
    _
  $region15: #{model_forward.5} parent=0 // pred_check_branch
    %27 = sbr.rel (0) target = $region17
  $region16: #{model_forward.5} parent=0 // pred_region
    _
  $region17: #{model_forward.5} parent=0 // pred_fallthru
    _
  // Predicated region
  $region18: #{model_forward.5} parent=0 // pred_check
    _
  $region19: #{model_forward.5} parent=0 // pred_check_branch
    %29 = sbr.rel (0) target = $region21
  $region20: #{model_forward.5} parent=0 // pred_region
    _
  $region21: #{model_forward.5} parent=0 // pred_fallthru
    _
  // Predicated region
  $region22: #{model_forward.5} parent=0 // pred_check
    _
  $region23: #{model_forward.5} parent=0 // pred_check_branch
    %31 = sbr.rel (0) target = $region25
  $region24: #{model_forward.5} parent=0 // pred_region
    _
  $region25: #{model_forward.5} parent=0 // pred_fallthru
    _
  // Predicated region
  $region26: #{model_forward.5} parent=0 // pred_check
    _
  $region27: #{model_forward.5} parent=0 // pred_check_branch
    %33 = sbr.rel (0) target = $region29
  $region28: #{model_forward.5} parent=0 // pred_region
    _
  $region29: #{model_forward.5} parent=0 // pred_fallthru
    _
  // Predicated region
  $region30: #{model_forward.5} parent=0 // pred_check
    _
  $region31: #{model_forward.5} parent=0 // pred_check_branch
    %35 = sbr.rel (0) target = $region33
  $region32: #{model_forward.5} parent=0 // pred_region
    _
  $region33: #{model_forward.5} parent=0 // pred_fallthru
    _
  // Predicated region
  $region34: #{model_forward.5} parent=0 // pred_check
    _
  $region35: #{model_forward.5} parent=0 // pred_check_branch
    %37 = sbr.rel (0) target = $region37
  $region36: #{model_forward.5} parent=0 // pred_region
    _
  $region37: #{model_forward.5} parent=0 // pred_fallthru
    _
  // Predicated region
  $region38: #{model_forward.5} parent=0 // pred_check
    _
  $region39: #{model_forward.5} parent=0 // pred_check_branch
    %39 = sbr.rel (0) target = $region41
  $region40: #{model_forward.5} parent=0 // pred_region
    _
  $region41: #{model_forward.5} parent=0 // pred_fallthru
    _
  // Predicated region
  $region42: #{model_forward.5} parent=0 // pred_check
    _
  $region43: #{model_forward.5} parent=0 // pred_check_branch
    %41 = sbr.rel (0) target = $region45
  $region44: #{model_forward.5} parent=0 // pred_region
    _
  $region45: #{model_forward.5} parent=0 // pred_fallthru
    _
  // Predicated region
  $region46: #{model_forward.5} parent=0 // pred_check
    _
  $region47: #{model_forward.5} parent=0 // pred_check_branch
    %43 = sbr.rel (0) target = $region49
  $region48: #{model_forward.5} parent=0 // pred_region
    _
  $region49: #{model_forward.5} parent=0 // pred_fallthru
    _
  // Predicated region
  $region50: #{model_forward.5} parent=0 // pred_check
    _
  $region51: #{model_forward.5} parent=0 // pred_check_branch
    %45 = sbr.rel (0) target = $region53
  $region52: #{model_forward.5} parent=0 // pred_region
    _
  $region53: #{model_forward.5} parent=0 // pred_fallthru
    _
  // Predicated region
  $region54: #{model_forward.5} parent=0 // pred_check
    _
  $region55: #{model_forward.5} parent=0 // pred_check_branch
    %47 = sbr.rel (0) target = $region57
  $region56: #{model_forward.5} parent=0 // pred_region
    _
  $region57: #{model_forward.5} parent=0 // pred_fallthru
    _
  // Predicated region
  $region58: #{model_forward.5} parent=0 // pred_check
    _
  $region59: #{model_forward.5} parent=0 // pred_check_branch
    %49 = sbr.rel (0) target = $region61
  $region60: #{model_forward.5} parent=0 // pred_region
    _
  $region61: #{model_forward.5} parent=0 // pred_fallthru
    _
  %v50 = vld [vmem:[%s0] sm:$0xf]
  %v51 = vld [vmem:[%s2] sm:$0x3f]
  %v52 = vld [vmem:[%s3] sm:$0x1]
  %v54 = vperm.slane %v52, 0
  %vm56 = vcmask 48128
  %v58 = vsel %vm56, %v50, 0
  %vm60 = vcmask 1045504
  %v62 = vsel %vm60, %v51, 0
  %64 = vmatpush.msra.mxu0 0.0
  %65 = vmatpush.msra.mxu0 0.0
  %66 = vmatpush.msra.mxu0 0.0
  %67 = vmatpush.msra.mxu0 0.0
  %68 = vmatpush.msra.mxu0 0.0
  %69 = vmatpush.msra.mxu0 0.0
  %70 = vmatpush.msra.mxu0 0.0
  %71 = vmatpush.msra.mxu0 0.0
  %72 = vmatpush.msra.mxu0 0.0
  %73 = vmatpush.msra.mxu0 0.0
  %74 = vmatpush.msra.mxu0 0.0
  %75 = vmatpush.msra.mxu0 0.0
  %76 = vmatpush.msra.mxu0 0.0
  %77 = vmatpush.msra.mxu0 0.0
  %78 = vmatpush.msra.mxu0 0.0
  %79 = vmatpush.msra.mxu0 %v62
  %80 = vmatmul.f32.gmra.mxu0 %v58
  %v81 = vpop.f32.mrf.mxu0
  %v82 = vadd.f32 %v54, %v81
  %83 = vdwg.mxu0
  %v84 = vmul.f32 %v82, 0.5
  %v85 = vtanh.pop %v84
  %v86 = vmul.f32 %v85, 0.5
  %v87 = vadd.f32 %v86, 0.5
  %v88 = vmul.f32 %v82, %v87
  %v89 = vld [vmem:[%s4] sm:$0xff]
  %v90 = vld [vmem:[%s4 + $0x8] sm:$0xff]
  %v91 = vld [vmem:[%s4 + $0x10] sm:$0xff]
  %v92 = vld [vmem:[%s4 + $0x18] sm:$0xff]
  %v93 = vld [vmem:[%s5] sm:$0x1]
  %v95 = vperm.slane %v93, 0
  %vm97 = vcmask 261120
  %v99 = vsel %vm97, %v88, 0
  %101 = vmatpush.msra.mxu0 0.0
  %102 = vmatpush.msra.mxu0 0.0
  %103 = vmatpush.msra.mxu0 0.0
  %104 = vmatpush.msra.mxu0 0.0
  %105 = vmatpush.msra.mxu0 0.0
  %106 = vmatpush.msra.mxu0 0.0
  %107 = vmatpush.msra.mxu0 0.0
  %108 = vmatpush.msra.mxu0 0.0
  %109 = vmatpush.msra.mxu0 0.0
  %110 = vmatpush.msra.mxu0 0.0
  %111 = vmatpush.msra.mxu0 0.0
  %112 = vmatpush.msra.mxu0 0.0
  %113 = vmatpush.msra.mxu0 %v92
  %114 = vmatpush.msra.mxu0 %v91
  %115 = vmatpush.msra.mxu0 %v90
  %116 = vmatpush.msra.mxu0 %v89
  %117 = vmatmul.f32.gmra.mxu0 %v99
  %v118 = vpop.f32.mrf.mxu0
  %v119 = vadd.f32 %v95, %v118
  %120 = vdwg.mxu0
  %v121 = vmul.f32 %v119, 0.5
  %v122 = vtanh.pop %v121
  %v123 = vmul.f32 %v122, 0.5
  %v124 = vadd.f32 %v123, 0.5
  %v125 = vmul.f32 %v119, %v124
  %v126 = vld [vmem:[%s6] sm:$0xff]
  %v127 = vld [vmem:[%s6 + $0x8] sm:$0xff]
  %v128 = vld [vmem:[%s6 + $0x10] sm:$0xff]
  %v129 = vld [vmem:[%s6 + $0x18] sm:$0xff]
  %v130 = vld [vmem:[%s6 + $0x20] sm:$0xff]
  %v131 = vld [vmem:[%s6 + $0x28] sm:$0xff]
  %v132 = vld [vmem:[%s6 + $0x30] sm:$0xff]
  %v133 = vld [vmem:[%s6 + $0x38] sm:$0xff]
  %v134 = vld [vmem:[%s7] sm:$0x1]
  %v136 = vperm.slane %v134, 0
  %vm138 = vcmask 523264
  %v140 = vsel %vm138, %v125, 0
  %142 = vmatpush.msra.mxu0 0.0
  %143 = vmatpush.msra.mxu0 0.0
  %144 = vmatpush.msra.mxu0 0.0
  %145 = vmatpush.msra.mxu0 0.0
  %146 = vmatpush.msra.mxu0 0.0
  %147 = vmatpush.msra.mxu0 0.0
  %148 = vmatpush.msra.mxu0 0.0
  %149 = vmatpush.msra.mxu0 0.0
  %150 = vmatpush.msra.mxu0 %v133
  %151 = vmatpush.msra.mxu0 %v132
  %152 = vmatpush.msra.mxu0 %v131
  %153 = vmatpush.msra.mxu0 %v130
  %154 = vmatpush.msra.mxu0 %v129
  %155 = vmatpush.msra.mxu0 %v128
  %156 = vmatpush.msra.mxu0 %v127
  %157 = vmatpush.msra.mxu0 %v126
  %158 = vmatmul.f32.gmra.mxu0 %v140
  %v159 = vpop.f32.mrf.mxu0
  %v160 = vadd.f32 %v136, %v159
  %161 = vdwg.mxu0
  %v162 = vmul.f32 %v160, 0.5
  %v163 = vtanh.pop %v162
  %v164 = vmul.f32 %v163, 0.5
  %v165 = vadd.f32 %v164, 0.5
  %v166 = vmul.f32 %v160, %v165
  %v167 = vld [vmem:[%s8] sm:$0xff]
  %v168 = vld [vmem:[%s8 + $0x8] sm:$0xff]
  %v169 = vld [vmem:[%s8 + $0x10] sm:$0xff]
  %v170 = vld [vmem:[%s8 + $0x18] sm:$0xff]
  %v171 = vld [vmem:[%s8 + $0x20] sm:$0xff]
  %v172 = vld [vmem:[%s8 + $0x28] sm:$0xff]
  %v173 = vld [vmem:[%s8 + $0x30] sm:$0xff]
  %v174 = vld [vmem:[%s8 + $0x38] sm:$0xff]
  %v175 = vld [vmem:[%s9] sm:$0x1]
  %v177 = vperm.slane %v175, 0
  %v180 = vsel %vm138, %v166, 0
  %182 = vmatpush.msra.mxu0 0.0
  %183 = vmatpush.msra.mxu0 0.0
  %184 = vmatpush.msra.mxu0 0.0
  %185 = vmatpush.msra.mxu0 0.0
  %186 = vmatpush.msra.mxu0 0.0
  %187 = vmatpush.msra.mxu0 0.0
  %188 = vmatpush.msra.mxu0 0.0
  %189 = vmatpush.msra.mxu0 0.0
  %190 = vmatpush.msra.mxu0 %v174
  %191 = vmatpush.msra.mxu0 %v173
  %192 = vmatpush.msra.mxu0 %v172
  %193 = vmatpush.msra.mxu0 %v171
  %194 = vmatpush.msra.mxu0 %v170
  %195 = vmatpush.msra.mxu0 %v169
  %196 = vmatpush.msra.mxu0 %v168
  %197 = vmatpush.msra.mxu0 %v167
  %198 = vmatmul.f32.gmra.mxu0 %v180
  %v199 = vpop.f32.mrf.mxu0
  %v200 = vadd.f32 %v177, %v199
  %201 = vdwg.mxu0
  %v202 = vmul.f32 %v200, 0.5
  %v203 = vtanh.pop %v202
  %v204 = vmul.f32 %v203, 0.5
  %v205 = vadd.f32 %v204, 0.5
  %v206 = vmul.f32 %v200, %v205
  %v207 = vld [vmem:[%s10] sm:$0xff]
  %v208 = vld [vmem:[%s10 + $0x8] sm:$0xff]
  %v209 = vld [vmem:[%s10 + $0x10] sm:$0xff]
  %v210 = vld [vmem:[%s10 + $0x18] sm:$0xff]
  %v211 = vld [vmem:[%s10 + $0x20] sm:$0xff]
  %v212 = vld [vmem:[%s10 + $0x28] sm:$0xff]
  %v213 = vld [vmem:[%s10 + $0x30] sm:$0xff]
  %v214 = vld [vmem:[%s10 + $0x38] sm:$0xff]
  %v215 = vld [vmem:[%s11] sm:$0x1]
  %v217 = vperm.slane %v215, 0
  %v220 = vsel %vm138, %v206, 0
  %222 = vmatpush.msra.mxu0 0.0
  %223 = vmatpush.msra.mxu0 0.0
  %224 = vmatpush.msra.mxu0 0.0
  %225 = vmatpush.msra.mxu0 0.0
  %226 = vmatpush.msra.mxu0 0.0
  %227 = vmatpush.msra.mxu0 0.0
  %228 = vmatpush.msra.mxu0 0.0
  %229 = vmatpush.msra.mxu0 0.0
  %230 = vmatpush.msra.mxu0 %v214
  %231 = vmatpush.msra.mxu0 %v213
  %232 = vmatpush.msra.mxu0 %v212
  %233 = vmatpush.msra.mxu0 %v211
  %234 = vmatpush.msra.mxu0 %v210
  %235 = vmatpush.msra.mxu0 %v209
  %236 = vmatpush.msra.mxu0 %v208
  %237 = vmatpush.msra.mxu0 %v207
  %238 = vmatmul.f32.gmra.mxu0 %v220
  %v239 = vpop.f32.mrf.mxu0
  %v240 = vadd.f32 %v217, %v239
  %241 = vdwg.mxu0
  %v242 = vmul.f32 %v240, 0.5
  %v243 = vtanh.pop %v242
  %v244 = vmul.f32 %v243, 0.5
  %v245 = vadd.f32 %v244, 0.5
  %v246 = vmul.f32 %v240, %v245
  %v247 = vld [vmem:[%s12] sm:$0xff]
  %v248 = vld [vmem:[%s12 + $0x8] sm:$0xff]
  %v249 = vld [vmem:[%s12 + $0x10] sm:$0xff]
  %v250 = vld [vmem:[%s12 + $0x18] sm:$0xff]
  %v251 = vld [vmem:[%s12 + $0x20] sm:$0xff]
  %v252 = vld [vmem:[%s12 + $0x28] sm:$0xff]
  %v253 = vld [vmem:[%s12 + $0x30] sm:$0xff]
  %v254 = vld [vmem:[%s12 + $0x38] sm:$0xff]
  %v255 = vld [vmem:[%s13] sm:$0x1]
  %v257 = vperm.slane %v255, 0
  %v260 = vsel %vm138, %v246, 0
  %262 = vmatpush.msra.mxu0 0.0
  %263 = vmatpush.msra.mxu0 0.0
  %264 = vmatpush.msra.mxu0 0.0
  %265 = vmatpush.msra.mxu0 0.0
  %266 = vmatpush.msra.mxu0 0.0
  %267 = vmatpush.msra.mxu0 0.0
  %268 = vmatpush.msra.mxu0 0.0
  %269 = vmatpush.msra.mxu0 0.0
  %270 = vmatpush.msra.mxu0 %v254
  %271 = vmatpush.msra.mxu0 %v253
  %272 = vmatpush.msra.mxu0 %v252
  %273 = vmatpush.msra.mxu0 %v251
  %274 = vmatpush.msra.mxu0 %v250
  %275 = vmatpush.msra.mxu0 %v249
  %276 = vmatpush.msra.mxu0 %v248
  %277 = vmatpush.msra.mxu0 %v247
  %278 = vmatmul.f32.gmra.mxu0 %v260
  %v279 = vpop.f32.mrf.mxu0
  %v280 = vadd.f32 %v257, %v279
  %281 = vdwg.mxu0
  %v282 = vmul.f32 %v280, 0.5
  %v283 = vtanh.pop %v282
  %v284 = vmul.f32 %v283, 0.5
  %v285 = vadd.f32 %v284, 0.5
  %v286 = vld [vmem:[%s14] sm:$0xff]
  %v287 = vld [vmem:[%s1] sm:$0xf]
  %289 = vset.pattern.permute.xlu0 0
  %290 = vperm.xlu0 %289, %v287
  %v291 = vpop.permute.xlu0 %290
  %v293 = vperm.slane %v286, 2
  %v294 = vmul.f32 %v291, %v293
  %295 = vset.pattern.permute.xlu0 1
  %296 = vperm.xlu0 %295, %v287
  %v297 = vpop.permute.xlu0 %296
  %v299 = vperm.slane %v286, 3
  %v300 = vmul.f32 %v297, %v299
  %v301 = vadd.f32 %v294, %v300
  %302 = vset.pattern.permute.xlu0 2
  %303 = vperm.xlu0 %302, %v287
  %v304 = vpop.permute.xlu0 %303
  %v306 = vperm.slane %v286, 4
  %v307 = vmul.f32 %v304, %v306
  %v308 = vadd.f32 %v301, %v307
  %309 = vset.pattern.permute.xlu0 3
  %310 = vperm.xlu0 %309, %v287
  %v311 = vpop.permute.xlu0 %310
  %v313 = vperm.slane %v286, 5
  %v314 = vmul.f32 %v311, %v313
  %v315 = vadd.f32 %v308, %v314
  %v316 = vperm.slane %v286, 6
  %v317 = vadd.f32 %v315, %v316
  %v318 = vperm.slane %v286, 1
  %v319 = vmul.f32 %v285, %v318
  %v320 = vperm.slane %v286, 0
  %v321 = vadd.f32 %v320, %v319
  %v322 = vmul.f32 %v285, %v321
  %v323 = vadd.f32 %v322, %v317
  %vm324 = vcmask 519168
  %325 = vst.msk [vmem:[%s15] sm:$0xf] %vm324, %v280
  %327 = vrot.lane.b32.xlu0 %v323, 64
  %v328 = vpop.permute.xlu0 %327
  %vm330 = vcmask 1043968
  %331 = vst.msk [vmem:[%s15] sm:$0xf] %vm330, %v328
  // Predicated region
  $region62: #{model_forward.5} parent=0 // pred_check
    _
  $region63: #{model_forward.5} parent=0 // pred_check_branch
    %333 = sbr.rel (0) target = $region65
  $region64: #{model_forward.5} parent=0 // pred_region
    _
  $region65: #{model_forward.5} parent=0 // pred_fallthru
    _
  // Predicated region
  $region66: #{model_forward.5} parent=0 // pred_check
    _
  $region67: #{model_forward.5} parent=0 // pred_check_branch
    %335 = sbr.rel (0) target = $region69
  $region68: #{model_forward.5} parent=0 // pred_region
    _
  $region69: #{model_forward.5} parent=0 // pred_fallthru
    _

</llo_original>
